<compile_context>
chip_gen: v5e
topology: v5e:2x2
jax: 0.10.0
libtpu: 0.0.40
codegen_flags: <defaults>
</compile_context>

<pallas_src>
import functools
import math

import jax
import jax.numpy as jnp
from jax.experimental import pallas as pl
from jax.experimental.pallas import tpu as pltpu

LANE = 128


# ------------------------------ fused kernel -------------------------------

def _gnn_kernel(num_layer, x_ref, pe_ref, adj_ref, pool_ref, w_ref, b_ref,
                out_ref):
    """Fused GNN forward for one block-diagonal graph batch.

    x_ref    (NB, 128) f32   raw node features in lanes [0, in_feat)
    pe_ref   (NB, 128) f32   WavePE encoding pre-placed in lanes [dim, dim+pe_dim)
    adj_ref  (NB, NB)  bf16  dense 0/1 adjacency (diagonal batch block)
    pool_ref (GB, NB)  bf16  0/1 graph-membership summation block
    w_ref    ((4+2L)*128, 128) f32  packed, BN-folded, zero-padded weights
    b_ref    (4+2L, 128)       f32  packed, zero-padded biases
    out_ref  (GB, 128) f32   lane-dense head output (lanes >= out_dim are 0)
    """

    def w(i):                      # weight slot i: static, tile-aligned slice
        return w_ref[i * LANE:(i + 1) * LANE, :]

    def b(i):                      # bias slot i: (1, 128), broadcast over rows
        return b_ref[i:i + 1, :]

    def mm(a, bb):                 # small dense matmuls stay f32
        return jnp.dot(a, bb, preferred_element_type=jnp.float32)

    adj = adj_ref[...]             # bf16, VMEM-resident, reused by every layer

    def spmm(t):                   # bf16 x bf16 MXU, f32 accumulation
        return jnp.dot(adj, t.astype(jnp.bfloat16),
                       preferred_element_type=jnp.float32)

    # --- node encoder: Lin(3,dim)+BN(folded) -> ReLU -> Lin(dim,dim) ---
    h = jnp.maximum(mm(x_ref[...], w(0)) + b(0), 0.0)
    h = mm(h, w(1)) + b(1)

    # --- concat([h, pe]) for free: PE already lives in lanes [dim, dim+pe_dim)
    h = h + pe_ref[...]

    # --- GIN layers (train_eps=False -> eps=0):
    #     z = ReLU(BNfold(agg @ W1 + b1)),  h = ReLU(z @ W2 + b2),  agg = h + adj@h
    # Projection-first reorder (exact):  agg @ W1 == (h @ W1) + adj @ (h @ W1),
    # so layer 0 needs only ONE adjacency pass despite the [h | pe] concat.
    for l in range(num_layer):
        s = 2 + 2 * l
        t = mm(h, w(s))                                    # (NB, 128) f32
        z = jnp.maximum(t + spmm(t) + b(s), 0.0)           # folded BN + ReLU
        h = jnp.maximum(mm(z, w(s + 1)) + b(s + 1), 0.0)   # Lin2 + layer .relu()

    # --- global_add_pool + head MLP (norm=None): Lin -> ReLU -> Lin ---
    s = 2 + 2 * num_layer
    g = jnp.dot(pool_ref[...], h.astype(jnp.bfloat16),
                preferred_element_type=jnp.float32)
    m = jnp.maximum(mm(g, w(s)) + b(s), 0.0)
    out_ref[...] = mm(m, w(s + 1)) + b(s + 1)


# --------------------------- parameter handling ----------------------------

def init_linear_params(key, fan_in, fan_out):
    k1, k2 = jax.random.split(key)
    bound = 1.0 / math.sqrt(fan_in)
    w = jax.random.uniform(k1, (fan_in, fan_out), jnp.float32, -bound, bound)
    b = jax.random.uniform(k2, (fan_out,), jnp.float32, -bound, bound)
    return w, b


def init_bn_params(dim):
    return (jnp.ones((dim,), jnp.float32),   # gamma
            jnp.zeros((dim,), jnp.float32),  # beta
            jnp.zeros((dim,), jnp.float32),  # running_mean
            jnp.ones((dim,), jnp.float32))   # running_var


def init_params(key, in_feat, pe_dim, dim, out_dim, num_layer):
    keys = jax.random.split(key, 4 + num_layer)
    params = {
        "enc1": init_linear_params(keys[0], in_feat, dim),
        "enc_bn": init_bn_params(dim),
        "enc2": init_linear_params(keys[1], dim, dim),
        "layers": [],
    }
    in_dim = dim + pe_dim
    for i in range(num_layer):
        lk = jax.random.split(keys[2 + i], 2)
        params["layers"].append({
            "lin1": init_linear_params(lk[0], in_dim, dim),
            "bn": init_bn_params(dim),
            "lin2": init_linear_params(lk[1], dim, dim),
        })
        in_dim = dim
    hk = jax.random.split(keys[-1], 2)
    params["head1"] = init_linear_params(hk[0], dim, dim)
    params["head2"] = init_linear_params(hk[1], dim, out_dim)
    return params


def fold_bn(w, b, bn, eps=1e-5):
    # Eval-mode BatchNorm folded into the preceding Linear.
    gamma, beta, mean, var = bn
    s = gamma / jnp.sqrt(var + eps)
    return w * s[None, :], b * s + (beta - mean * s)


def _pad2d(a, rows, cols):
    a = jnp.asarray(a, jnp.float32)
    return jnp.zeros((rows, cols), jnp.float32).at[:a.shape[0], :a.shape[1]].set(a)


def _pack_params(params):
    """Pack all (BN-folded) weights/biases into two tile-aligned f32 slabs."""
    mats, vecs = [], []
    ew1, eb1 = fold_bn(*params["enc1"], params["enc_bn"])
    ew2, eb2 = params["enc2"]
    mats += [ew1, ew2]
    vecs += [eb1, eb2]
    for lp in params["layers"]:
        w1, b1 = fold_bn(*lp["lin1"], lp["bn"])
        w2, b2 = lp["lin2"]
        mats += [w1, w2]
        vecs += [b1, b2]
    hw1, hb1 = params["head1"]
    hw2, hb2 = params["head2"]
    mats += [hw1, hw2]
    vecs += [hb1, hb2]
    w_slab = jnp.concatenate([_pad2d(m, LANE, LANE) for m in mats], axis=0)
    b_slab = jnp.concatenate([_pad2d(v.reshape(1, -1), 1, LANE) for v in vecs],
                             axis=0)
    return w_slab, b_slab


# ------------------------------ forward pass -------------------------------

def gnn_forward(params, x, pe, adj, pool_mat, *, node_block, graph_block):
    """adj / pool_mat must be block-diagonal: graph block i's nodes live inside
    node block i (standard block-diagonal graph batching, padded per block)."""
    num_layer = len(params["layers"])
    dim = params["enc2"][0].shape[1]
    pe_dim = pe.shape[1]
    out_dim = params["head2"][0].shape[1]
    n, g = x.shape[0], pool_mat.shape[0]

    assert x.shape[1] <= LANE and dim + pe_dim <= LANE and out_dim <= LANE
    assert n % node_block == 0 and g % graph_block == 0, \
        "pad nodes/graphs to block multiples"
    num_blocks = n // node_block
    assert g // graph_block == num_blocks

    # Lane-pad features; place the PE directly in lanes [dim, dim+pe_dim) so the
    # in-kernel [node_enc | pos_enc] concat is a single VPU add.
    x_pad = jnp.zeros((n, LANE), jnp.float32).at[:, :x.shape[1]].set(x)
    pe_pad = jnp.zeros((n, LANE), jnp.float32).at[:, dim:dim + pe_dim].set(pe)
    adj_bf = adj.astype(jnp.bfloat16)         # 0/1 -> exact in bf16
    pool_bf = pool_mat.astype(jnp.bfloat16)   # 0/1 -> exact in bf16
    w_slab, b_slab = _pack_params(params)

    nb, gb, L = node_block, graph_block, num_layer
    flops = int(num_blocks * (
        2 * (2 * nb * LANE * LANE)                                  # encoder
        + L * (2 * (2 * nb * LANE * LANE) + 2 * nb * nb * LANE)     # GIN layers
        + 2 * gb * nb * LANE                                        # pooling
        + 2 * (2 * gb * LANE * LANE)))                              # head
    bytes_accessed = int(x_pad.size * 4 + pe_pad.size * 4 + adj_bf.size * 2 +
                         pool_bf.size * 2 + w_slab.size * 4 + b_slab.size * 4 +
                         g * LANE * 4)

    out = pl.pallas_call(
        functools.partial(_gnn_kernel, num_layer),
        out_shape=jax.ShapeDtypeStruct((g, LANE), jnp.float32),
        grid=(num_blocks,),
        in_specs=[
            pl.BlockSpec((nb, LANE), lambda i: (i, 0)),        # x (lane-padded)
            pl.BlockSpec((nb, LANE), lambda i: (i, 0)),        # pe (lane-padded)
            pl.BlockSpec((nb, nb), lambda i: (i, i)),          # adj diag block
            pl.BlockSpec((gb, nb), lambda i: (i, i)),          # pool diag block
            pl.BlockSpec(w_slab.shape, lambda i: (0, 0)),      # weights (resident)
            pl.BlockSpec(b_slab.shape, lambda i: (0, 0)),      # biases  (resident)
        ],
        out_specs=pl.BlockSpec((gb, LANE), lambda i: (i, 0)),
        compiler_params=pltpu.CompilerParams(
            dimension_semantics=("parallel",),       # shards blocks on v7x's 2 TCs
            vmem_limit_bytes=32 * 1024 * 1024),
        cost_estimate=pl.CostEstimate(flops=flops, transcendentals=0,
                                      bytes_accessed=bytes_accessed),
    )(x_pad, pe_pad, adj_bf, pool_bf, w_slab, b_slab)
    return out[:, :out_dim]


def _reference_forward(params, x, pe, adj, pool_mat, eps=1e-5):
    # Pure-JAX f32 reference (BN applied explicitly) for a sanity check.
    def bn(h, p):
        gamma, beta, mean, var = p
        return (h - mean) / jnp.sqrt(var + eps) * gamma + beta

    w, b = params["enc1"]
    h = jnp.maximum(bn(x @ w + b, params["enc_bn"]), 0.0)
    w, b = params["enc2"]
    h = h @ w + b
    h = jnp.concatenate([h, pe], axis=-1)
    for lp in params["layers"]:
        agg = h + adj @ h
        w, b = lp["lin1"]
        z = jnp.maximum(bn(agg @ w + b, lp["bn"]), 0.0)
        w, b = lp["lin2"]
        h = jnp.maximum(z @ w + b, 0.0)
    g = pool_mat @ h
    w, b = params["head1"]
    m = jnp.maximum(g @ w + b, 0.0)
    w, b = params["head2"]
    return m @ w + b


# ---------------------------------- main -----------------------------------

if __name__ == "__main__":
    NUM_GRAPHS = 16
    NODES_PER_GRAPH = 16
    N = NUM_GRAPHS * NODES_PER_GRAPH          # 256 nodes
    IN_FEAT = 3                               # PROTEINS node features
    PE_DIM = 20                               # WavePE width (52 = 32 + 20)
    DIM = 32                                  # atom_dim
    OUT_DIM = 4
    NUM_LAYER = 2
    GRAPHS_PER_BLOCK = 8                      # -> node_block = 128, grid = (2,)
    NODES_PER_BLOCK = GRAPHS_PER_BLOCK * NODES_PER_GRAPH

    key = jax.random.PRNGKey(0)
    kx, kpe, kp = jax.random.split(key, 3)

    x = jax.random.normal(kx, (N, IN_FEAT), dtype=jnp.float32)
    pe = jax.random.normal(kpe, (N, PE_DIM), dtype=jnp.float32)

    batch_vec = jnp.repeat(jnp.arange(NUM_GRAPHS), NODES_PER_GRAPH)

    # Bidirectional ring edges within each graph; dense adjacency A[dst, src]=1
    # (GINConv sum aggregation == A @ X). Block-diagonal by construction.
    src, dst = [], []
    for gph in range(NUM_GRAPHS):
        off = gph * NODES_PER_GRAPH
        for i in range(NODES_PER_GRAPH):
            a, b = off + i, off + (i + 1) % NODES_PER_GRAPH
            src += [a, b]
            dst += [b, a]
    adj = jnp.zeros((N, N), jnp.float32).at[jnp.array(dst), jnp.array(src)].add(1.0)

    # global_add_pool as a [num_graphs, N] 0/1 summation matrix (block-diagonal).
    pool_mat = (batch_vec[None, :] == jnp.arange(NUM_GRAPHS)[:, None]).astype(jnp.float32)

    params = init_params(kp, IN_FEAT, PE_DIM, DIM, OUT_DIM, NUM_LAYER)

    out = gnn_forward(params, x, pe, adj, pool_mat,
                      node_block=NODES_PER_BLOCK, graph_block=GRAPHS_PER_BLOCK)
    out = jax.block_until_ready(out)
    assert out.shape == (NUM_GRAPHS, OUT_DIM)

    ref = _reference_forward(params, x, pe, adj, pool_mat)
    # Tolerance accounts for bf16 operands on the adjacency/pooling MXU path
    # (f32 accumulation everywhere).
    assert jnp.allclose(out, ref, rtol=5e-2, atol=5e-2), (out, ref)

    print("KERNEL_OK")
</pallas_src>

<mosaic_0001>
module attributes {stable_mosaic.version = 11 : i64} {
  func.func @_gnn_kernel(%arg0: i32, %arg1: memref<128x128xf32, #tpu.memory_space<vmem>>, %arg2: memref<128x128xf32, #tpu.memory_space<vmem>>, %arg3: memref<128x128xbf16, #tpu.memory_space<vmem>>, %arg4: memref<8x128xbf16, #tpu.memory_space<vmem>>, %arg5: memref<1024x128xf32, #tpu.memory_space<vmem>>, %arg6: memref<8x128xf32, #tpu.memory_space<vmem>>, %arg7: memref<8x128xf32, #tpu.memory_space<vmem>>) attributes {dimension_semantics = [#tpu.dimension_semantics<parallel>], iteration_bounds = array<i64: 2>, scalar_prefetch = 0 : i64, scratch_operands = 0 : i64, tpu.core_type = #tpu.core_type<tc>, window_params = [{transform_indices = @transform_0, window_bounds = array<i64: 128, 128>}, {transform_indices = @transform_1, window_bounds = array<i64: 128, 128>}, {transform_indices = @transform_2, window_bounds = array<i64: 128, 128>}, {transform_indices = @transform_3, window_bounds = array<i64: 8, 128>}, {pipeline_mode = #tpu.pipeline_mode<synchronous>, transform_indices = @transform_4, window_bounds = array<i64: 1024, 128>}, {pipeline_mode = #tpu.pipeline_mode<synchronous>, transform_indices = @transform_5, window_bounds = array<i64: 8, 128>}, {transform_indices = @transform_6, window_bounds = array<i64: 8, 128>}]} {
    %c0 = arith.constant 0 : index
    %c0_0 = arith.constant 0 : index
    %0 = vector.load %arg3[%c0, %c0_0] : memref<128x128xbf16, #tpu.memory_space<vmem>>, vector<128x128xbf16>
    %c0_1 = arith.constant 0 : index
    %c0_2 = arith.constant 0 : index
    %1 = vector.load %arg1[%c0_1, %c0_2] : memref<128x128xf32, #tpu.memory_space<vmem>>, vector<128x128xf32>
    %c0_3 = arith.constant 0 : index
    %c0_4 = arith.constant 0 : index
    %2 = vector.load %arg5[%c0_3, %c0_4] : memref<1024x128xf32, #tpu.memory_space<vmem>>, vector<128x128xf32>
    %cst = arith.constant dense<0.000000e+00> : vector<128x128xf32>
    %3 = tpu.matmul %1, %2, %cst {dimension_numbers = #tpu.dot_dimension_numbers<[1], [0], [0], [1], [0, 0, 1, 1], [], []>} : vector<128x128xf32>, vector<128x128xf32>, vector<128x128xf32> -> vector<128x128xf32>
    %c0_5 = arith.constant 0 : index
    %c0_6 = arith.constant 0 : index
    %4 = vector.load %arg6[%c0_5, %c0_6] : memref<8x128xf32, #tpu.memory_space<vmem>>, vector<1x128xf32>
    %5 = vector.broadcast %4 : vector<1x128xf32> to vector<128x128xf32>
    %6 = arith.addf %3, %5 : vector<128x128xf32>
    %cst_7 = arith.constant 0.000000e+00 : f32
    %7 = vector.broadcast %cst_7 : f32 to vector<128x128xf32>
    %8 = arith.maximumf %6, %7 : vector<128x128xf32>
    %c128 = arith.constant 128 : index
    %c0_8 = arith.constant 0 : index
    %9 = vector.load %arg5[%c128, %c0_8] : memref<1024x128xf32, #tpu.memory_space<vmem>>, vector<128x128xf32>
    %cst_9 = arith.constant dense<0.000000e+00> : vector<128x128xf32>
    %10 = tpu.matmul %8, %9, %cst_9 {dimension_numbers = #tpu.dot_dimension_numbers<[1], [0], [0], [1], [0, 0, 1, 1], [], []>} : vector<128x128xf32>, vector<128x128xf32>, vector<128x128xf32> -> vector<128x128xf32>
    %c1 = arith.constant 1 : index
    %c0_10 = arith.constant 0 : index
    %11 = vector.load %arg6[%c1, %c0_10] : memref<8x128xf32, #tpu.memory_space<vmem>>, vector<1x128xf32>
    %12 = vector.broadcast %11 : vector<1x128xf32> to vector<128x128xf32>
    %13 = arith.addf %10, %12 : vector<128x128xf32>
    %c0_11 = arith.constant 0 : index
    %c0_12 = arith.constant 0 : index
    %14 = vector.load %arg2[%c0_11, %c0_12] : memref<128x128xf32, #tpu.memory_space<vmem>>, vector<128x128xf32>
    %15 = arith.addf %13, %14 : vector<128x128xf32>
    %c256 = arith.constant 256 : index
    %c0_13 = arith.constant 0 : index
    %16 = vector.load %arg5[%c256, %c0_13] : memref<1024x128xf32, #tpu.memory_space<vmem>>, vector<128x128xf32>
    %cst_14 = arith.constant dense<0.000000e+00> : vector<128x128xf32>
    %17 = tpu.matmul %15, %16, %cst_14 {dimension_numbers = #tpu.dot_dimension_numbers<[1], [0], [0], [1], [0, 0, 1, 1], [], []>} : vector<128x128xf32>, vector<128x128xf32>, vector<128x128xf32> -> vector<128x128xf32>
    %18 = arith.truncf %17 : vector<128x128xf32> to vector<128x128xbf16>
    %cst_15 = arith.constant dense<0.000000e+00> : vector<128x128xf32>
    %19 = tpu.matmul %0, %18, %cst_15 {dimension_numbers = #tpu.dot_dimension_numbers<[1], [0], [0], [1], [0, 0, 1, 1], [], []>} : vector<128x128xbf16>, vector<128x128xbf16>, vector<128x128xf32> -> vector<128x128xf32>
    %20 = arith.addf %17, %19 : vector<128x128xf32>
    %c2 = arith.constant 2 : index
    %c0_16 = arith.constant 0 : index
    %21 = vector.load %arg6[%c2, %c0_16] : memref<8x128xf32, #tpu.memory_space<vmem>>, vector<1x128xf32>
    %22 = vector.broadcast %21 : vector<1x128xf32> to vector<128x128xf32>
    %23 = arith.addf %20, %22 : vector<128x128xf32>
    %cst_17 = arith.constant 0.000000e+00 : f32
    %24 = vector.broadcast %cst_17 : f32 to vector<128x128xf32>
    %25 = arith.maximumf %23, %24 : vector<128x128xf32>
    %c384 = arith.constant 384 : index
    %c0_18 = arith.constant 0 : index
    %26 = vector.load %arg5[%c384, %c0_18] : memref<1024x128xf32, #tpu.memory_space<vmem>>, vector<128x128xf32>
    %cst_19 = arith.constant dense<0.000000e+00> : vector<128x128xf32>
    %27 = tpu.matmul %25, %26, %cst_19 {dimension_numbers = #tpu.dot_dimension_numbers<[1], [0], [0], [1], [0, 0, 1, 1], [], []>} : vector<128x128xf32>, vector<128x128xf32>, vector<128x128xf32> -> vector<128x128xf32>
    %c3 = arith.constant 3 : index
    %c0_20 = arith.constant 0 : index
    %28 = vector.load %arg6[%c3, %c0_20] : memref<8x128xf32, #tpu.memory_space<vmem>>, vector<1x128xf32>
    %29 = vector.broadcast %28 : vector<1x128xf32> to vector<128x128xf32>
    %30 = arith.addf %27, %29 : vector<128x128xf32>
    %cst_21 = arith.constant 0.000000e+00 : f32
    %31 = vector.broadcast %cst_21 : f32 to vector<128x128xf32>
    %32 = arith.maximumf %30, %31 : vector<128x128xf32>
    %c512 = arith.constant 512 : index
    %c0_22 = arith.constant 0 : index
    %33 = vector.load %arg5[%c512, %c0_22] : memref<1024x128xf32, #tpu.memory_space<vmem>>, vector<128x128xf32>
    %cst_23 = arith.constant dense<0.000000e+00> : vector<128x128xf32>
    %34 = tpu.matmul %32, %33, %cst_23 {dimension_numbers = #tpu.dot_dimension_numbers<[1], [0], [0], [1], [0, 0, 1, 1], [], []>} : vector<128x128xf32>, vector<128x128xf32>, vector<128x128xf32> -> vector<128x128xf32>
    %35 = arith.truncf %34 : vector<128x128xf32> to vector<128x128xbf16>
    %cst_24 = arith.constant dense<0.000000e+00> : vector<128x128xf32>
    %36 = tpu.matmul %0, %35, %cst_24 {dimension_numbers = #tpu.dot_dimension_numbers<[1], [0], [0], [1], [0, 0, 1, 1], [], []>} : vector<128x128xbf16>, vector<128x128xbf16>, vector<128x128xf32> -> vector<128x128xf32>
    %37 = arith.addf %34, %36 : vector<128x128xf32>
    %c4 = arith.constant 4 : index
    %c0_25 = arith.constant 0 : index
    %38 = vector.load %arg6[%c4, %c0_25] : memref<8x128xf32, #tpu.memory_space<vmem>>, vector<1x128xf32>
    %39 = vector.broadcast %38 : vector<1x128xf32> to vector<128x128xf32>
    %40 = arith.addf %37, %39 : vector<128x128xf32>
    %cst_26 = arith.constant 0.000000e+00 : f32
    %41 = vector.broadcast %cst_26 : f32 to vector<128x128xf32>
    %42 = arith.maximumf %40, %41 : vector<128x128xf32>
    %c640 = arith.constant 640 : index
    %c0_27 = arith.constant 0 : index
    %43 = vector.load %arg5[%c640, %c0_27] : memref<1024x128xf32, #tpu.memory_space<vmem>>, vector<128x128xf32>
    %cst_28 = arith.constant dense<0.000000e+00> : vector<128x128xf32>
    %44 = tpu.matmul %42, %43, %cst_28 {dimension_numbers = #tpu.dot_dimension_numbers<[1], [0], [0], [1], [0, 0, 1, 1], [], []>} : vector<128x128xf32>, vector<128x128xf32>, vector<128x128xf32> -> vector<128x128xf32>
    %c5 = arith.constant 5 : index
    %c0_29 = arith.constant 0 : index
    %45 = vector.load %arg6[%c5, %c0_29] : memref<8x128xf32, #tpu.memory_space<vmem>>, vector<1x128xf32>
    %46 = vector.broadcast %45 : vector<1x128xf32> to vector<128x128xf32>
    %47 = arith.addf %44, %46 : vector<128x128xf32>
    %cst_30 = arith.constant 0.000000e+00 : f32
    %48 = vector.broadcast %cst_30 : f32 to vector<128x128xf32>
    %49 = arith.maximumf %47, %48 : vector<128x128xf32>
    %c0_31 = arith.constant 0 : index
    %c0_32 = arith.constant 0 : index
    %50 = vector.load %arg4[%c0_31, %c0_32] : memref<8x128xbf16, #tpu.memory_space<vmem>>, vector<8x128xbf16>
    %51 = arith.truncf %49 : vector<128x128xf32> to vector<128x128xbf16>
    %cst_33 = arith.constant dense<0.000000e+00> : vector<8x128xf32>
    %52 = tpu.matmul %50, %51, %cst_33 {dimension_numbers = #tpu.dot_dimension_numbers<[1], [0], [0], [1], [0, 0, 1, 1], [], []>} : vector<8x128xbf16>, vector<128x128xbf16>, vector<8x128xf32> -> vector<8x128xf32>
    %c768 = arith.constant 768 : index
    %c0_34 = arith.constant 0 : index
    %53 = vector.load %arg5[%c768, %c0_34] : memref<1024x128xf32, #tpu.memory_space<vmem>>, vector<128x128xf32>
    %cst_35 = arith.constant dense<0.000000e+00> : vector<8x128xf32>
    %54 = tpu.matmul %52, %53, %cst_35 {dimension_numbers = #tpu.dot_dimension_numbers<[1], [0], [0], [1], [0, 0, 1, 1], [], []>} : vector<8x128xf32>, vector<128x128xf32>, vector<8x128xf32> -> vector<8x128xf32>
    %c6 = arith.constant 6 : index
    %c0_36 = arith.constant 0 : index
    %55 = vector.load %arg6[%c6, %c0_36] : memref<8x128xf32, #tpu.memory_space<vmem>>, vector<1x128xf32>
    %56 = vector.broadcast %55 : vector<1x128xf32> to vector<8x128xf32>
    %57 = arith.addf %54, %56 : vector<8x128xf32>
    %cst_37 = arith.constant 0.000000e+00 : f32
    %58 = vector.broadcast %cst_37 : f32 to vector<8x128xf32>
    %59 = arith.maximumf %57, %58 : vector<8x128xf32>
    %c896 = arith.constant 896 : index
    %c0_38 = arith.constant 0 : index
    %60 = vector.load %arg5[%c896, %c0_38] : memref<1024x128xf32, #tpu.memory_space<vmem>>, vector<128x128xf32>
    %cst_39 = arith.constant dense<0.000000e+00> : vector<8x128xf32>
    %61 = tpu.matmul %59, %60, %cst_39 {dimension_numbers = #tpu.dot_dimension_numbers<[1], [0], [0], [1], [0, 0, 1, 1], [], []>} : vector<8x128xf32>, vector<128x128xf32>, vector<8x128xf32> -> vector<8x128xf32>
    %c7 = arith.constant 7 : index
    %c0_40 = arith.constant 0 : index
    %62 = vector.load %arg6[%c7, %c0_40] : memref<8x128xf32, #tpu.memory_space<vmem>>, vector<1x128xf32>
    %63 = vector.broadcast %62 : vector<1x128xf32> to vector<8x128xf32>
    %64 = arith.addf %61, %63 : vector<8x128xf32>
    %c0_41 = arith.constant 0 : index
    %c0_42 = arith.constant 0 : index
    %65 = vector.load %arg7[%c0_41, %c0_42] : memref<8x128xf32, #tpu.memory_space<vmem>>, vector<8x128xf32>
    tpu.vector_store %arg7[%c0_41, %c0_42], %64 {strides = array<i32>} : memref<8x128xf32, #tpu.memory_space<vmem>>, vector<8x128xf32>,
    return
  }
  func.func @transform_0(%arg0: i32) -> (i32, i32) {
    %c0_i32 = arith.constant 0 : i32
    %c0_i32_0 = arith.constant 0 : i32
    return %arg0, %c0_i32 : i32, i32
  }
  func.func @transform_1(%arg0: i32) -> (i32, i32) {
    %c0_i32 = arith.constant 0 : i32
    %c0_i32_0 = arith.constant 0 : i32
    return %arg0, %c0_i32 : i32, i32
  }
  func.func @transform_2(%arg0: i32) -> (i32, i32) {
    %c0_i32 = arith.constant 0 : i32
    return %arg0, %arg0 : i32, i32
  }
  func.func @transform_3(%arg0: i32) -> (i32, i32) {
    %c0_i32 = arith.constant 0 : i32
    return %arg0, %arg0 : i32, i32
  }
  func.func @transform_4(%arg0: i32) -> (i32, i32) {
    %c0_i32 = arith.constant 0 : i32
    %c0_i32_0 = arith.constant 0 : i32
    %c0_i32_1 = arith.constant 0 : i32
    return %c0_i32, %c0_i32_0 : i32, i32
  }
  func.func @transform_5(%arg0: i32) -> (i32, i32) {
    %c0_i32 = arith.constant 0 : i32
    %c0_i32_0 = arith.constant 0 : i32
    %c0_i32_1 = arith.constant 0 : i32
    return %c0_i32, %c0_i32_0 : i32, i32
  }
  func.func @transform_6(%arg0: i32) -> (i32, i32) {
    %c0_i32 = arith.constant 0 : i32
    %c0_i32_0 = arith.constant 0 : i32
    return %arg0, %c0_i32 : i32, i32
  }
}

</mosaic_0001>

<llo_original>
// kernel: tpu_custom_call.1
$region0: #{tpu_custom_call.1}
  #allocation0 [shape = 'u32[]', space=smem, size = 0x4, offset = 0x4, fixed_abs, tag = 'smem constant byte address 0x4 - core index']
  #allocation1 [shape = 'u32[72,128]{1,0:T(1,128)}', space=vmem, size = 0x9000, scoped, tag = 'internal scratch']
  %s0 = inlined_call_operand.hbm [shape: f32[256,128], index: 0, kind: input, shape index: {}]
  %s1 = inlined_call_operand.hbm [shape: f32[256,128], index: 1, kind: input, shape index: {}]
  %s2 = inlined_call_operand.hbm [shape: bf16[256,256], index: 2, kind: input, shape index: {}]
  %s3 = inlined_call_operand.hbm [shape: bf16[16,256], index: 3, kind: input, shape index: {}]
  %s4 = inlined_call_operand.hbm [shape: f32[1024,128], index: 4, kind: input, shape index: {}]
  %s5 = inlined_call_operand.hbm [shape: f32[8,128], index: 5, kind: input, shape index: {}]
  %s6 = inlined_call_operand.hbm [shape: f32[16,128], index: 6, kind: output, shape index: {}]
  %s7 = sld [smem:[#allocation0]]
  $region81: #{tpu_custom_call.1} parent=0
    _
  %s9 = ssub.s32 1, %s7
  %s10 = scalar_select 0, %s9, %s7
  $region1: #{tpu_custom_call.1} parent=0
    #allocation2 [shape = 'u8[131072]{0}', space=vmem, size = 0x20000, scoped, tag = 'input window, operand 0']
    #allocation3 [shape = 's32[2]{0}', space=sflag, size = 0x8, scoped, tag = 'scoped memory for tpu_custom_call.1']
    #allocation4 [shape = 's32[2]{0}', space=sflag, size = 0x8, scoped, tag = 'scoped memory for tpu_custom_call.1']
    #allocation5 [shape = 'u8[131072]{0}', space=vmem, size = 0x20000, scoped, tag = 'input window, operand 1']
    #allocation6 [shape = 's32[2]{0}', space=sflag, size = 0x8, scoped, tag = 'scoped memory for tpu_custom_call.1']
    #allocation7 [shape = 'u8[65536]{0}', space=vmem, size = 0x10000, scoped, tag = 'input window, operand 2']
    #allocation8 [shape = 'u8[4096]{0}', space=vmem, size = 0x1000, scoped, tag = 'input window, operand 3']
    #allocation9 [shape = 's32[2]{0}', space=sflag, size = 0x8, scoped, tag = 'scoped memory for tpu_custom_call.1']
    #allocation10 [shape = 'u8[524288]{0}', space=vmem, size = 0x80000, scoped, tag = 'input window, operand 4, single buffered']
    #allocation11 [shape = 'u8[4096]{0}', space=vmem, size = 0x1000, scoped, tag = 'input window, operand 5, single buffered']
    #allocation12 [shape = 's32[1]{0}', space=sflag, size = 0x4, scoped, tag = 'scoped memory for tpu_custom_call.1']
    #allocation13 [shape = 'u8[8192]{0}', space=vmem, size = 0x2000, scoped, tag = 'output window, operand 0']
    %11 = vsyncpa [#allocation3], 0
    %s12 = scalar_lea.sflag [#allocation3], 1
    %13 = vsyncpa %s12, 0
    %14 = vsyncpa [#allocation6], 0
    %s15 = scalar_lea.sflag [#allocation6], 1
    %16 = vsyncpa %s15, 0
    %17 = vsyncpa [#allocation9], 0
    %s18 = scalar_lea.sflag [#allocation9], 1
    %19 = vsyncpa %s18, 0
    %20 = vsyncpa [#allocation12], 0
    %21 = vsyncpa [#allocation4], 0
    %s22 = scalar_lea.sflag [#allocation4], 1
    %23 = vsyncpa %s22, 0
    loop: start=0, step=1, limit=4
    $region2: #{tpu_custom_call.1} parent=1 // loop_pre_header
      _
    $region3: #{tpu_custom_call.1} parent=1 // loop_header
      %s25 = sphi 0, %s29
      %p26 = scmp.ge.s32.totalorder %s25, 4
      %s35 = sphi 0, %s37
      %s38 = sphi 0, %s35
      %s39 = sphi 0, %s38
      %s55 = sphi 0, %s39
      %s61 = sphi 0, %s63
      %s64 = sphi 0, %s61
      %s65 = sphi 0, %s64
      %s81 = sphi 0, %s65
      %s89 = sphi 0, %s91
      %s92 = sphi 0, %s89
      %s93 = sphi 0, %s92
      %s109 = sphi 0, %s93
      %s117 = sphi 0, %s119
      %s120 = sphi 0, %s117
      %s121 = sphi 0, %s120
      %s137 = sphi 0, %s121
      %s141 = sphi 0, %s141
      %s143 = sphi 0, %s141
      %s144 = sphi 0, %s143
      %s158 = sphi 0, %s144
      %s162 = sphi 0, %s162
      %s164 = sphi 0, %s162
      %s165 = sphi 0, %s164
      %s179 = sphi 0, %s165
      %s185 = sphi 0, %s187
      %s188 = sphi 0, %s185
      %s189 = sphi 0, %s188
      %s205 = sphi 0, %s189
    $region4: #{tpu_custom_call.1} parent=1 // loop_header_branch
      %28 = sbr.rel (%p26) target = $region8
    $region5: #{tpu_custom_call.1} parent=1 // loop_body
      %s30 = ssub.s32 %s25, 1
      %s31 = ssub.s32 %s25, 2
      %s32 = sadd.s32 %s25, 1
      %s33 = ssub.s32 %s25, %s32
      %p34 = scmp.eq.s32.totalorder %s33, 0
      %s36 = sadd.s32 %s35, 1
      %s37 = scalar_select %p34, %s35, %s36
      %p40 = pneg %p34
      %p41 = scmp.eq.s32.totalorder %s25, 1
      %p42 = por %p40, %p41
      %p43 = scmp.ne.s32.totalorder %s35, %s38
      %p44 = scmp.eq.s32.totalorder %s25, 0
      %p45 = por %p43, %p44
      %p46 = scmp.ne.s32.totalorder %s35, %s38
      %p47 = scmp.eq.s32.totalorder %s30, 1
      %p48 = por %p46, %p47
      %p49 = scmp.ne.s32.totalorder %s38, %s39
      %p50 = scmp.eq.s32.totalorder %s30, 0
      %p51 = por %p49, %p50
      %p52 = scmp.ne.s32.totalorder %s38, %s39
      %p53 = scmp.eq.s32.totalorder %s31, 1
      %p54 = por %p52, %p53
      %p56 = scmp.ne.s32.totalorder %s39, %s55
      %p57 = scmp.eq.s32.totalorder %s31, 0
      %p58 = por %p56, %p57
      %s59 = ssub.s32 %s25, %s32
      %p60 = scmp.eq.s32.totalorder %s59, 0
      %s62 = sadd.s32 %s61, 1
      %s63 = scalar_select %p60, %s61, %s62
      %p66 = pneg %p60
      %p67 = scmp.eq.s32.totalorder %s25, 1
      %p68 = por %p66, %p67
      %p69 = scmp.ne.s32.totalorder %s61, %s64
      %p70 = scmp.eq.s32.totalorder %s25, 0
      %p71 = por %p69, %p70
      %p72 = scmp.ne.s32.totalorder %s61, %s64
      %p73 = scmp.eq.s32.totalorder %s30, 1
      %p74 = por %p72, %p73
      %p75 = scmp.ne.s32.totalorder %s64, %s65
      %p76 = scmp.eq.s32.totalorder %s30, 0
      %p77 = por %p75, %p76
      %p78 = scmp.ne.s32.totalorder %s64, %s65
      %p79 = scmp.eq.s32.totalorder %s31, 1
      %p80 = por %p78, %p79
      %p82 = scmp.ne.s32.totalorder %s65, %s81
      %p83 = scmp.eq.s32.totalorder %s31, 0
      %p84 = por %p82, %p83
      %s85 = ssub.s32 %s25, %s32
      %s86 = ssub.s32 %s25, %s32
      %s87 = sor.u32 %s85, %s86
      %p88 = scmp.eq.s32.totalorder %s87, 0
      %s90 = sadd.s32 %s89, 1
      %s91 = scalar_select %p88, %s89, %s90
      %p94 = pneg %p88
      %p95 = scmp.eq.s32.totalorder %s25, 1
      %p96 = por %p94, %p95
      %p97 = scmp.ne.s32.totalorder %s89, %s92
      %p98 = scmp.eq.s32.totalorder %s25, 0
      %p99 = por %p97, %p98
      %p100 = scmp.ne.s32.totalorder %s89, %s92
      %p101 = scmp.eq.s32.totalorder %s30, 1
      %p102 = por %p100, %p101
      %p103 = scmp.ne.s32.totalorder %s92, %s93
      %p104 = scmp.eq.s32.totalorder %s30, 0
      %p105 = por %p103, %p104
      %p106 = scmp.ne.s32.totalorder %s92, %s93
      %p107 = scmp.eq.s32.totalorder %s31, 1
      %p108 = por %p106, %p107
      %p110 = scmp.ne.s32.totalorder %s93, %s109
      %p111 = scmp.eq.s32.totalorder %s31, 0
      %p112 = por %p110, %p111
      %s113 = ssub.s32 %s25, %s32
      %s114 = ssub.s32 %s25, %s32
      %s115 = sor.u32 %s113, %s114
      %p116 = scmp.eq.s32.totalorder %s115, 0
      %s118 = sadd.s32 %s117, 1
      %s119 = scalar_select %p116, %s117, %s118
      %p122 = pneg %p116
      %p123 = scmp.eq.s32.totalorder %s25, 1
      %p124 = por %p122, %p123
      %p125 = scmp.ne.s32.totalorder %s117, %s120
      %p126 = scmp.eq.s32.totalorder %s25, 0
      %p127 = por %p125, %p126
      %p128 = scmp.ne.s32.totalorder %s117, %s120
      %p129 = scmp.eq.s32.totalorder %s30, 1
      %p130 = por %p128, %p129
      %p131 = scmp.ne.s32.totalorder %s120, %s121
      %p132 = scmp.eq.s32.totalorder %s30, 0
      %p133 = por %p131, %p132
      %p134 = scmp.ne.s32.totalorder %s120, %s121
      %p135 = scmp.eq.s32.totalorder %s31, 1
      %p136 = por %p134, %p135
      %p138 = scmp.ne.s32.totalorder %s121, %s137
      %p139 = scmp.eq.s32.totalorder %s31, 0
      %p140 = por %p138, %p139
      %s142 = sadd.s32 %s141, 1
      %p145 = scmp.eq.s32.totalorder %s25, 1
      %p146 = scmp.ne.s32.totalorder %s141, %s143
      %p147 = scmp.eq.s32.totalorder %s25, 0
      %p148 = por %p146, %p147
      %p149 = scmp.ne.s32.totalorder %s141, %s143
      %p150 = scmp.eq.s32.totalorder %s30, 1
      %p151 = por %p149, %p150
      %p152 = scmp.ne.s32.totalorder %s143, %s144
      %p153 = scmp.eq.s32.totalorder %s30, 0
      %p154 = por %p152, %p153
      %p155 = scmp.ne.s32.totalorder %s143, %s144
      %p156 = scmp.eq.s32.totalorder %s31, 1
      %p157 = por %p155, %p156
      %p159 = scmp.ne.s32.totalorder %s144, %s158
      %p160 = scmp.eq.s32.totalorder %s31, 0
      %p161 = por %p159, %p160
      %s163 = sadd.s32 %s162, 1
      %p166 = scmp.eq.s32.totalorder %s25, 1
      %p167 = scmp.ne.s32.totalorder %s162, %s164
      %p168 = scmp.eq.s32.totalorder %s25, 0
      %p169 = por %p167, %p168
      %p170 = scmp.ne.s32.totalorder %s162, %s164
      %p171 = scmp.eq.s32.totalorder %s30, 1
      %p172 = por %p170, %p171
      %p173 = scmp.ne.s32.totalorder %s164, %s165
      %p174 = scmp.eq.s32.totalorder %s30, 0
      %p175 = por %p173, %p174
      %p176 = scmp.ne.s32.totalorder %s164, %s165
      %p177 = scmp.eq.s32.totalorder %s31, 1
      %p178 = por %p176, %p177
      %p180 = scmp.ne.s32.totalorder %s165, %s179
      %p181 = scmp.eq.s32.totalorder %s31, 0
      %p182 = por %p180, %p181
      %s183 = ssub.s32 %s25, %s32
      %p184 = scmp.eq.s32.totalorder %s183, 0
      %s186 = sadd.s32 %s185, 1
      %s187 = scalar_select %p184, %s185, %s186
      %p190 = pneg %p184
      %p191 = scmp.eq.s32.totalorder %s25, 1
      %p192 = por %p190, %p191
      %p193 = scmp.ne.s32.totalorder %s185, %s188
      %p194 = scmp.eq.s32.totalorder %s25, 0
      %p195 = por %p193, %p194
      %p196 = scmp.ne.s32.totalorder %s185, %s188
      %p197 = scmp.eq.s32.totalorder %s30, 1
      %p198 = por %p196, %p197
      %p199 = scmp.ne.s32.totalorder %s188, %s189
      %p200 = scmp.eq.s32.totalorder %s30, 0
      %p201 = por %p199, %p200
      %p202 = scmp.ne.s32.totalorder %s188, %s189
      %p203 = scmp.eq.s32.totalorder %s31, 1
      %p204 = por %p202, %p203
      %p206 = scmp.ne.s32.totalorder %s189, %s205
      %p207 = scmp.eq.s32.totalorder %s31, 0
      %p208 = por %p206, %p207
      %p209 = scmp.le.s32.totalorder 1, %s25
      %p210 = scmp.lt.s32.totalorder %s25, 3
      %p211 = pnand %p209, %p210
      %p212 = pneg %p211
      // Predicated region
      $region9: #{tpu_custom_call.1} parent=5 // pred_check
        _
      $region10: #{tpu_custom_call.1} parent=5 // pred_check_branch
        %214 = sbr.rel (%p211) target = $region12
      $region11: #{tpu_custom_call.1} parent=5 // pred_region
        %s215 = ssub.s32 %s25, 1
        // Predicated region
        $region13: #{tpu_custom_call.1} parent=11 // pred_check
          %p216 = pneg %p154
        $region14: #{tpu_custom_call.1} parent=11 // pred_check_branch
          %218 = sbr.rel (%p216) target = $region16
        $region15: #{tpu_custom_call.1} parent=11 // pred_region
          %220 = vsyncadd [#allocation9], 0
          %s221 = sshll.u32 %s4, 4
          %s222 = int_to_ptr.hbm [resolvable:$true] %s221
          %s223 = sshll.u32 [#allocation10], 4
          %s224 = int_to_ptr.vmem [resolvable:$true] %s223
          %229 = dma.hbm_to_vmem [thread:$0]  %s222, 16384, %s224, [#allocation9], 128, 128, 8
        $region16: #{tpu_custom_call.1} parent=11 // pred_fallthru
          _
        // Predicated region
        $region17: #{tpu_custom_call.1} parent=11 // pred_check
          %p230 = pneg %p175
        $region18: #{tpu_custom_call.1} parent=11 // pred_check_branch
          %232 = sbr.rel (%p230) target = $region20
        $region19: #{tpu_custom_call.1} parent=11 // pred_region
          %234 = vsyncadd [#allocation12], 0
          %s236 = sshll.u32 %s5, 4
          %s237 = int_to_ptr.hbm [resolvable:$true] %s236
          %s238 = sshll.u32 [#allocation11], 4
          %s239 = int_to_ptr.vmem [resolvable:$true] %s238
          %241 = dma.hbm_to_vmem [thread:$0]  %s237, 128, %s239, [#allocation12]
        $region20: #{tpu_custom_call.1} parent=11 // pred_fallthru
          _
      $region12: #{tpu_custom_call.1} parent=5 // pred_fallthru
        _
      %p242 = scmp.lt.s32.totalorder %s25, 2
      // Predicated region
      $region21: #{tpu_custom_call.1} parent=5 // pred_check
        %p243 = pneg %p242
      $region22: #{tpu_custom_call.1} parent=5 // pred_check_branch
        %245 = sbr.rel (%p243) target = $region24
      $region23: #{tpu_custom_call.1} parent=5 // pred_region
        // Predicated region
        $region25: #{tpu_custom_call.1} parent=23 // pred_check
          %p246 = pneg %p45
        $region26: #{tpu_custom_call.1} parent=23 // pred_check_branch
          %248 = sbr.rel (%p246) target = $region28
        $region27: #{tpu_custom_call.1} parent=23 // pred_region
          %s249 = sand.u32 %s35, 1
          %s250 = scalar_lea.sflag [#allocation3], %s249
          %s251 = sand.u32 %s35, 1
          %s252 = smul.addr %s251, 128
          %s253 = scalar_lea.vmem [#allocation2], %s252
          %s254 = smul.u32 16, %s25
          %256 = vsyncadd %s250, 0
          %s257 = smul.addr %s254, 8
          %s258 = scalar_lea.hbm %s0, %s257
          %s259 = sshll.u32 %s258, 4
          %s260 = int_to_ptr.hbm [resolvable:$true] %s259
          %s261 = sshll.u32 %s253, 4
          %s262 = int_to_ptr.vmem [resolvable:$true] %s261
          %267 = dma.hbm_to_vmem [thread:$0]  %s260, 2048, %s262, %s250, 128, 128, 8
        $region28: #{tpu_custom_call.1} parent=23 // pred_fallthru
          _
        // Predicated region
        $region29: #{tpu_custom_call.1} parent=23 // pred_check
          %p268 = pneg %p71
        $region30: #{tpu_custom_call.1} parent=23 // pred_check_branch
          %270 = sbr.rel (%p268) target = $region32
        $region31: #{tpu_custom_call.1} parent=23 // pred_region
          %s271 = sand.u32 %s25, 1
          %s272 = scalar_lea.sflag [#allocation6], %s271
          %s273 = sand.u32 %s61, 1
          %s274 = smul.addr %s273, 128
          %s275 = scalar_lea.vmem [#allocation5], %s274
          %s276 = smul.u32 16, %s25
          %278 = vsyncadd %s272, 0
          %s279 = smul.addr %s276, 8
          %s280 = scalar_lea.hbm %s1, %s279
          %s281 = sshll.u32 %s280, 4
          %s282 = int_to_ptr.hbm [resolvable:$true] %s281
          %s283 = sshll.u32 %s275, 4
          %s284 = int_to_ptr.vmem [resolvable:$true] %s283
          %289 = dma.hbm_to_vmem [thread:$0]  %s282, 2048, %s284, %s272, 128, 128, 8
        $region32: #{tpu_custom_call.1} parent=23 // pred_fallthru
          _
        // Predicated region
        $region33: #{tpu_custom_call.1} parent=23 // pred_check
          %p290 = pneg %p99
        $region34: #{tpu_custom_call.1} parent=23 // pred_check_branch
          %292 = sbr.rel (%p290) target = $region36
        $region35: #{tpu_custom_call.1} parent=23 // pred_region
          %s293 = sand.u32 %s25, 1
          %s294 = scalar_lea.sflag [#allocation6], %s293
          %s295 = sand.u32 %s89, 1
          %s296 = smul.addr %s295, 64
          %s297 = scalar_lea.vmem [#allocation7], %s296
          %s298 = smul.u32 16, %s25
          %300 = vsyncadd %s294, 0
          %s301 = smul.addr %s298, 2
          %s302 = sadd.s32 %s25, %s301
          %s303 = smul.addr %s302, 4
          %s304 = scalar_lea.hbm %s2, %s303
          %s305 = sshll.u32 %s304, 4
          %s306 = int_to_ptr.hbm [resolvable:$true] %s305
          %s307 = sshll.u32 %s297, 4
          %s308 = int_to_ptr.vmem [resolvable:$true] %s307
          %313 = dma.hbm_to_vmem [thread:$0]  %s306, 1024, %s308, %s294, 128, 64, 4
        $region36: #{tpu_custom_call.1} parent=23 // pred_fallthru
          _
        // Predicated region
        $region37: #{tpu_custom_call.1} parent=23 // pred_check
          %p314 = pneg %p127
        $region38: #{tpu_custom_call.1} parent=23 // pred_check_branch
          %316 = sbr.rel (%p314) target = $region40
        $region39: #{tpu_custom_call.1} parent=23 // pred_region
          %s317 = sand.u32 %s25, 1
          %s318 = scalar_lea.sflag [#allocation9], %s317
          %s319 = sand.u32 %s117, 1
          %s320 = smul.addr %s319, 4
          %s321 = scalar_lea.vmem [#allocation8], %s320
          %323 = vsyncadd %s318, 0
          %s324 = smul.addr %s25, 2
          %s325 = sadd.s32 %s25, %s324
          %s326 = smul.addr %s325, 4
          %s327 = scalar_lea.hbm %s3, %s326
          %s329 = sshll.u32 %s327, 4
          %s330 = int_to_ptr.hbm [resolvable:$true] %s329
          %s331 = sshll.u32 %s321, 4
          %s332 = int_to_ptr.vmem [resolvable:$true] %s331
          %334 = dma.hbm_to_vmem [thread:$0]  %s330, 64, %s332, %s318
        $region40: #{tpu_custom_call.1} parent=23 // pred_fallthru
          _
      $region24: #{tpu_custom_call.1} parent=5 // pred_fallthru
        _
      %p335 = scmp.le.s32.totalorder 1, %s25
      %p336 = scmp.lt.s32.totalorder %s25, 3
      %p337 = pnand %p335, %p336
      %p338 = pneg %p337
      // Predicated region
      $region41: #{tpu_custom_call.1} parent=5 // pred_check
        _
      $region42: #{tpu_custom_call.1} parent=5 // pred_check_branch
        %340 = sbr.rel (%p337) target = $region44
      $region43: #{tpu_custom_call.1} parent=5 // pred_region
        %s341 = ssub.s32 %s25, 1
        %s342 = sand.u32 %s38, 1
        %s343 = scalar_lea.sflag [#allocation3], %s342
        %s344 = sand.u32 %s38, 1
        %s345 = smul.addr %s344, 128
        %s346 = scalar_lea.vmem [#allocation2], %s345
        // Predicated region
        $region45: #{tpu_custom_call.1} parent=43 // pred_check
          %p347 = pneg %p51
        $region46: #{tpu_custom_call.1} parent=43 // pred_check_branch
          %349 = sbr.rel (%p347) target = $region48
        $region47: #{tpu_custom_call.1} parent=43 // pred_region
          %351 = dma.done %s343, 2048
        $region48: #{tpu_custom_call.1} parent=43 // pred_fallthru
          _
        %s352 = sand.u32 %s30, 1
        %s353 = scalar_lea.sflag [#allocation6], %s352
        %s354 = sand.u32 %s64, 1
        %s355 = smul.addr %s354, 128
        %s356 = scalar_lea.vmem [#allocation5], %s355
        // Predicated region
        $region49: #{tpu_custom_call.1} parent=43 // pred_check
          %p357 = pneg %p77
        $region50: #{tpu_custom_call.1} parent=43 // pred_check_branch
          %359 = sbr.rel (%p357) target = $region52
        $region51: #{tpu_custom_call.1} parent=43 // pred_region
          %361 = dma.done %s353, 2048
        $region52: #{tpu_custom_call.1} parent=43 // pred_fallthru
          _
        %s362 = sand.u32 %s30, 1
        %s363 = scalar_lea.sflag [#allocation6], %s362
        %s364 = sand.u32 %s92, 1
        %s365 = smul.addr %s364, 64
        %s366 = scalar_lea.vmem [#allocation7], %s365
        // Predicated region
        $region53: #{tpu_custom_call.1} parent=43 // pred_check
          %p367 = pneg %p105
        $region54: #{tpu_custom_call.1} parent=43 // pred_check_branch
          %369 = sbr.rel (%p367) target = $region56
        $region55: #{tpu_custom_call.1} parent=43 // pred_region
          %371 = dma.done %s363, 1024
        $region56: #{tpu_custom_call.1} parent=43 // pred_fallthru
          _
        %s372 = sand.u32 %s30, 1
        %s373 = scalar_lea.sflag [#allocation9], %s372
        %s374 = sand.u32 %s120, 1
        %s375 = smul.addr %s374, 4
        %s376 = scalar_lea.vmem [#allocation8], %s375
        // Predicated region
        $region57: #{tpu_custom_call.1} parent=43 // pred_check
          %p377 = pneg %p133
        $region58: #{tpu_custom_call.1} parent=43 // pred_check_branch
          %379 = sbr.rel (%p377) target = $region60
        $region59: #{tpu_custom_call.1} parent=43 // pred_region
          %381 = dma.done %s373, 64
        $region60: #{tpu_custom_call.1} parent=43 // pred_fallthru
          _
        // Predicated region
        $region61: #{tpu_custom_call.1} parent=43 // pred_check
          %p382 = pneg %p154
        $region62: #{tpu_custom_call.1} parent=43 // pred_check_branch
          %384 = sbr.rel (%p382) target = $region64
        $region63: #{tpu_custom_call.1} parent=43 // pred_region
          %386 = dma.done [#allocation9], 16384
        $region64: #{tpu_custom_call.1} parent=43 // pred_fallthru
          _
        // Predicated region
        $region65: #{tpu_custom_call.1} parent=43 // pred_check
          %p387 = pneg %p175
        $region66: #{tpu_custom_call.1} parent=43 // pred_check_branch
          %389 = sbr.rel (%p387) target = $region68
        $region67: #{tpu_custom_call.1} parent=43 // pred_region
          %391 = dma.done [#allocation12], 128
        $region68: #{tpu_custom_call.1} parent=43 // pred_fallthru
          _
        %s392 = sand.u32 %s38, 1
        %s393 = scalar_lea.sflag [#allocation3], %s392
        %s394 = sand.u32 %s38, 1
        %s395 = smul.addr %s394, 128
        %s396 = scalar_lea.vmem [#allocation2], %s395
        %p397 = pneg %p51
        %p398 = pneg %p48
        %s399 = sand.u32 %s30, 1
        %s400 = scalar_lea.sflag [#allocation6], %s399
        %s401 = sand.u32 %s64, 1
        %s402 = smul.addr %s401, 128
        %s403 = scalar_lea.vmem [#allocation5], %s402
        %p404 = pneg %p77
        %p405 = pneg %p74
        %s406 = sand.u32 %s30, 1
        %s407 = scalar_lea.sflag [#allocation6], %s406
        %s408 = sand.u32 %s92, 1
        %s409 = smul.addr %s408, 64
        %s410 = scalar_lea.vmem [#allocation7], %s409
        %p411 = pneg %p105
        %p412 = pneg %p102
        %s413 = sand.u32 %s30, 1
        %s414 = scalar_lea.sflag [#allocation9], %s413
        %s415 = sand.u32 %s120, 1
        %s416 = smul.addr %s415, 4
        %s417 = scalar_lea.vmem [#allocation8], %s416
        %p418 = pneg %p133
        %p419 = pneg %p130
        %p420 = pneg %p154
        %p421 = pneg %p151
        %p422 = pneg %p175
        %p423 = pneg %p172
        %p424 = pneg %p201
        %p425 = pneg %p198
        %s426 = sand.u32 %s188, 1
        %s427 = scalar_lea.sflag [#allocation4], %s426
        %s428 = sand.u32 %s188, 1
        %s429 = smul.addr %s428, 8
        %s430 = scalar_lea.vmem [#allocation13], %s429
        %s431 = smul.u32 16, %s30
        %s432 = smul.u32 16, %s30
        %s433 = smul.u32 16, %s30
        %v434 = vld [vmem:[%s366] sm:$0xf]
        %v435 = vld [vmem:[%s366 + $0x4] sm:$0xf]
        %v436 = vld [vmem:[%s366 + $0x8] sm:$0xf]
        %v437 = vld [vmem:[%s366 + $0xc] sm:$0xf]
        %v438 = vld [vmem:[%s366 + $0x10] sm:$0xf]
        %v439 = vld [vmem:[%s366 + $0x14] sm:$0xf]
        %v440 = vld [vmem:[%s366 + $0x18] sm:$0xf]
        %v441 = vld [vmem:[%s366 + $0x1c] sm:$0xf]
        %v442 = vld [vmem:[%s366 + $0x20] sm:$0xf]
        %v443 = vld [vmem:[%s366 + $0x24] sm:$0xf]
        %v444 = vld [vmem:[%s366 + $0x28] sm:$0xf]
        %v445 = vld [vmem:[%s366 + $0x2c] sm:$0xf]
        %v446 = vld [vmem:[%s366 + $0x30] sm:$0xf]
        %v447 = vld [vmem:[%s366 + $0x34] sm:$0xf]
        %v448 = vld [vmem:[%s366 + $0x38] sm:$0xf]
        %v449 = vld [vmem:[%s366 + $0x3c] sm:$0xf]
        %v450 = vld [vmem:[%s346] sm:$0xff]
        %v451 = vld [vmem:[%s346 + $0x8] sm:$0xff]
        %v452 = vld [vmem:[%s346 + $0x10] sm:$0xff]
        %v453 = vld [vmem:[%s346 + $0x18] sm:$0xff]
        %v454 = vld [vmem:[%s346 + $0x20] sm:$0xff]
        %v455 = vld [vmem:[%s346 + $0x28] sm:$0xff]
        %v456 = vld [vmem:[%s346 + $0x30] sm:$0xff]
        %v457 = vld [vmem:[%s346 + $0x38] sm:$0xff]
        %v458 = vld [vmem:[%s346 + $0x40] sm:$0xff]
        %v459 = vld [vmem:[%s346 + $0x48] sm:$0xff]
        %v460 = vld [vmem:[%s346 + $0x50] sm:$0xff]
        %v461 = vld [vmem:[%s346 + $0x58] sm:$0xff]
        %v462 = vld [vmem:[%s346 + $0x60] sm:$0xff]
        %v463 = vld [vmem:[%s346 + $0x68] sm:$0xff]
        %v464 = vld [vmem:[%s346 + $0x70] sm:$0xff]
        %v465 = vld [vmem:[%s346 + $0x78] sm:$0xff]
        %v466 = vld [vmem:[#allocation10] sm:$0xff]
        %v467 = vld [vmem:[#allocation10 + $0x8] sm:$0xff]
        %v468 = vld [vmem:[#allocation10 + $0x10] sm:$0xff]
        %v469 = vld [vmem:[#allocation10 + $0x18] sm:$0xff]
        %v470 = vld [vmem:[#allocation10 + $0x20] sm:$0xff]
        %v471 = vld [vmem:[#allocation10 + $0x28] sm:$0xff]
        %v472 = vld [vmem:[#allocation10 + $0x30] sm:$0xff]
        %v473 = vld [vmem:[#allocation10 + $0x38] sm:$0xff]
        %v474 = vld [vmem:[#allocation10 + $0x40] sm:$0xff]
        %v475 = vld [vmem:[#allocation10 + $0x48] sm:$0xff]
        %v476 = vld [vmem:[#allocation10 + $0x50] sm:$0xff]
        %v477 = vld [vmem:[#allocation10 + $0x58] sm:$0xff]
        %v478 = vld [vmem:[#allocation10 + $0x60] sm:$0xff]
        %v479 = vld [vmem:[#allocation10 + $0x68] sm:$0xff]
        %v480 = vld [vmem:[#allocation10 + $0x70] sm:$0xff]
        %v481 = vld [vmem:[#allocation10 + $0x78] sm:$0xff]
        %v482 = vld [vmem:[#allocation11] sm:$0x1]
        %v483 = vperm.slane %v482, 0
        %484 = vmatpush.msra.mxu0 %v481
        %485 = vmatpush.msra.mxu0 %v480
        %486 = vmatpush.msra.mxu0 %v479
        %487 = vmatpush.msra.mxu0 %v478
        %488 = vmatpush.msra.mxu0 %v477
        %489 = vmatpush.msra.mxu0 %v476
        %490 = vmatpush.msra.mxu0 %v475
        %491 = vmatpush.msra.mxu0 %v474
        %492 = vmatpush.msra.mxu0 %v473
        %493 = vmatpush.msra.mxu0 %v472
        %494 = vmatpush.msra.mxu0 %v471
        %495 = vmatpush.msra.mxu0 %v470
        %496 = vmatpush.msra.mxu0 %v469
        %497 = vmatpush.msra.mxu0 %v468
        %498 = vmatpush.msra.mxu0 %v467
        %499 = vmatpush.msra.mxu0 %v466
        %500 = vmatmul.f32.gmra.mxu0 %v450
        %v501 = vpop.f32.mrf.mxu0
        %v502 = vadd.f32 %v483, %v501
        %503 = vmatmul.f32.gmra.mxu0 %v451
        %v504 = vpop.f32.mrf.mxu0
        %v505 = vadd.f32 %v483, %v504
        %506 = vmatmul.f32.gmra.mxu0 %v452
        %v507 = vpop.f32.mrf.mxu0
        %v508 = vadd.f32 %v483, %v507
        %509 = vmatmul.f32.gmra.mxu0 %v453
        %v510 = vpop.f32.mrf.mxu0
        %v511 = vadd.f32 %v483, %v510
        %512 = vmatmul.f32.gmra.mxu0 %v454
        %v513 = vpop.f32.mrf.mxu0
        %v514 = vadd.f32 %v483, %v513
        %515 = vmatmul.f32.gmra.mxu0 %v455
        %v516 = vpop.f32.mrf.mxu0
        %v517 = vadd.f32 %v483, %v516
        %518 = vmatmul.f32.gmra.mxu0 %v456
        %v519 = vpop.f32.mrf.mxu0
        %v520 = vadd.f32 %v483, %v519
        %521 = vmatmul.f32.gmra.mxu0 %v457
        %v522 = vpop.f32.mrf.mxu0
        %v523 = vadd.f32 %v483, %v522
        %524 = vmatmul.f32.gmra.mxu0 %v458
        %v525 = vpop.f32.mrf.mxu0
        %v526 = vadd.f32 %v483, %v525
        %527 = vmatmul.f32.gmra.mxu0 %v459
        %v528 = vpop.f32.mrf.mxu0
        %v529 = vadd.f32 %v483, %v528
        %530 = vmatmul.f32.gmra.mxu0 %v460
        %v531 = vpop.f32.mrf.mxu0
        %v532 = vadd.f32 %v483, %v531
        %533 = vmatmul.f32.gmra.mxu0 %v461
        %v534 = vpop.f32.mrf.mxu0
        %v535 = vadd.f32 %v483, %v534
        %536 = vmatmul.f32.gmra.mxu0 %v462
        %v537 = vpop.f32.mrf.mxu0
        %v538 = vadd.f32 %v483, %v537
        %539 = vmatmul.f32.gmra.mxu0 %v463
        %v540 = vpop.f32.mrf.mxu0
        %v541 = vadd.f32 %v483, %v540
        %542 = vmatmul.f32.gmra.mxu0 %v464
        %v543 = vpop.f32.mrf.mxu0
        %v544 = vadd.f32 %v483, %v543
        %545 = vmatmul.f32.gmra.mxu0 %v465
        %v546 = vpop.f32.mrf.mxu0
        %v547 = vadd.f32 %v483, %v546
        %548 = vdwg.mxu0
        %v549 = vmax.f32 %v502, 0.0
        %v550 = vmax.f32 %v505, 0.0
        %v551 = vmax.f32 %v508, 0.0
        %v552 = vmax.f32 %v511, 0.0
        %v553 = vmax.f32 %v514, 0.0
        %v554 = vmax.f32 %v517, 0.0
        %v555 = vmax.f32 %v520, 0.0
        %v556 = vmax.f32 %v523, 0.0
        %v557 = vmax.f32 %v526, 0.0
        %v558 = vmax.f32 %v529, 0.0
        %v559 = vmax.f32 %v532, 0.0
        %v560 = vmax.f32 %v535, 0.0
        %v561 = vmax.f32 %v538, 0.0
        %v562 = vmax.f32 %v541, 0.0
        %v563 = vmax.f32 %v544, 0.0
        %v564 = vmax.f32 %v547, 0.0
        %v565 = vld [vmem:[#allocation10 + $0x80] sm:$0xff]
        %v566 = vld [vmem:[#allocation10 + $0x88] sm:$0xff]
        %v567 = vld [vmem:[#allocation10 + $0x90] sm:$0xff]
        %v568 = vld [vmem:[#allocation10 + $0x98] sm:$0xff]
        %v569 = vld [vmem:[#allocation10 + $0xa0] sm:$0xff]
        %v570 = vld [vmem:[#allocation10 + $0xa8] sm:$0xff]
        %v571 = vld [vmem:[#allocation10 + $0xb0] sm:$0xff]
        %v572 = vld [vmem:[#allocation10 + $0xb8] sm:$0xff]
        %v573 = vld [vmem:[#allocation10 + $0xc0] sm:$0xff]
        %v574 = vld [vmem:[#allocation10 + $0xc8] sm:$0xff]
        %v575 = vld [vmem:[#allocation10 + $0xd0] sm:$0xff]
        %v576 = vld [vmem:[#allocation10 + $0xd8] sm:$0xff]
        %v577 = vld [vmem:[#allocation10 + $0xe0] sm:$0xff]
        %v578 = vld [vmem:[#allocation10 + $0xe8] sm:$0xff]
        %v579 = vld [vmem:[#allocation10 + $0xf0] sm:$0xff]
        %v580 = vld [vmem:[#allocation10 + $0xf8] sm:$0xff]
        %v581 = vld [vmem:[#allocation11 + $0x1] sm:$0x1]
        %v582 = vperm.slane %v581, 0
        %583 = vmatpush.msra.mxu0 %v580
        %584 = vmatpush.msra.mxu0 %v579
        %585 = vmatpush.msra.mxu0 %v578
        %586 = vmatpush.msra.mxu0 %v577
        %587 = vmatpush.msra.mxu0 %v576
        %588 = vmatpush.msra.mxu0 %v575
        %589 = vmatpush.msra.mxu0 %v574
        %590 = vmatpush.msra.mxu0 %v573
        %591 = vmatpush.msra.mxu0 %v572
        %592 = vmatpush.msra.mxu0 %v571
        %593 = vmatpush.msra.mxu0 %v570
        %594 = vmatpush.msra.mxu0 %v569
        %595 = vmatpush.msra.mxu0 %v568
        %596 = vmatpush.msra.mxu0 %v567
        %597 = vmatpush.msra.mxu0 %v566
        %598 = vmatpush.msra.mxu0 %v565
        %599 = vmatmul.f32.gmra.mxu0 %v549
        %v600 = vpop.f32.mrf.mxu0
        %v601 = vadd.f32 %v582, %v600
        %602 = vmatmul.f32.gmra.mxu0 %v550
        %v603 = vpop.f32.mrf.mxu0
        %v604 = vadd.f32 %v582, %v603
        %605 = vmatmul.f32.gmra.mxu0 %v551
        %v606 = vpop.f32.mrf.mxu0
        %v607 = vadd.f32 %v582, %v606
        %608 = vmatmul.f32.gmra.mxu0 %v552
        %v609 = vpop.f32.mrf.mxu0
        %v610 = vadd.f32 %v582, %v609
        %611 = vmatmul.f32.gmra.mxu0 %v553
        %v612 = vpop.f32.mrf.mxu0
        %v613 = vadd.f32 %v582, %v612
        %614 = vmatmul.f32.gmra.mxu0 %v554
        %v615 = vpop.f32.mrf.mxu0
        %v616 = vadd.f32 %v582, %v615
        %617 = vmatmul.f32.gmra.mxu0 %v555
        %v618 = vpop.f32.mrf.mxu0
        %v619 = vadd.f32 %v582, %v618
        %620 = vmatmul.f32.gmra.mxu0 %v556
        %v621 = vpop.f32.mrf.mxu0
        %v622 = vadd.f32 %v582, %v621
        %623 = vmatmul.f32.gmra.mxu0 %v557
        %v624 = vpop.f32.mrf.mxu0
        %v625 = vadd.f32 %v582, %v624
        %626 = vmatmul.f32.gmra.mxu0 %v558
        %v627 = vpop.f32.mrf.mxu0
        %v628 = vadd.f32 %v582, %v627
        %629 = vmatmul.f32.gmra.mxu0 %v559
        %v630 = vpop.f32.mrf.mxu0
        %v631 = vadd.f32 %v582, %v630
        %632 = vmatmul.f32.gmra.mxu0 %v560
        %v633 = vpop.f32.mrf.mxu0
        %v634 = vadd.f32 %v582, %v633
        %635 = vmatmul.f32.gmra.mxu0 %v561
        %v636 = vpop.f32.mrf.mxu0
        %v637 = vadd.f32 %v582, %v636
        %638 = vmatmul.f32.gmra.mxu0 %v562
        %v639 = vpop.f32.mrf.mxu0
        %v640 = vadd.f32 %v582, %v639
        %641 = vmatmul.f32.gmra.mxu0 %v563
        %v642 = vpop.f32.mrf.mxu0
        %v643 = vadd.f32 %v582, %v642
        %644 = vmatmul.f32.gmra.mxu0 %v564
        %v645 = vpop.f32.mrf.mxu0
        %v646 = vadd.f32 %v582, %v645
        %647 = vdwg.mxu0
        %v648 = vld [vmem:[%s356] sm:$0xff]
        %v649 = vld [vmem:[%s356 + $0x8] sm:$0xff]
        %v650 = vld [vmem:[%s356 + $0x10] sm:$0xff]
        %v651 = vld [vmem:[%s356 + $0x18] sm:$0xff]
        %v652 = vld [vmem:[%s356 + $0x20] sm:$0xff]
        %v653 = vld [vmem:[%s356 + $0x28] sm:$0xff]
        %v654 = vld [vmem:[%s356 + $0x30] sm:$0xff]
        %v655 = vld [vmem:[%s356 + $0x38] sm:$0xff]
        %v656 = vld [vmem:[%s356 + $0x40] sm:$0xff]
        %v657 = vld [vmem:[%s356 + $0x48] sm:$0xff]
        %v658 = vld [vmem:[%s356 + $0x50] sm:$0xff]
        %v659 = vld [vmem:[%s356 + $0x58] sm:$0xff]
        %v660 = vld [vmem:[%s356 + $0x60] sm:$0xff]
        %v661 = vld [vmem:[%s356 + $0x68] sm:$0xff]
        %v662 = vld [vmem:[%s356 + $0x70] sm:$0xff]
        %v663 = vld [vmem:[%s356 + $0x78] sm:$0xff]
        %v664 = vadd.f32 %v601, %v648
        %v665 = vadd.f32 %v604, %v649
        %v666 = vadd.f32 %v607, %v650
        %v667 = vadd.f32 %v610, %v651
        %v668 = vadd.f32 %v613, %v652
        %v669 = vadd.f32 %v616, %v653
        %v670 = vadd.f32 %v619, %v654
        %v671 = vadd.f32 %v622, %v655
        %v672 = vadd.f32 %v625, %v656
        %v673 = vadd.f32 %v628, %v657
        %v674 = vadd.f32 %v631, %v658
        %v675 = vadd.f32 %v634, %v659
        %v676 = vadd.f32 %v637, %v660
        %v677 = vadd.f32 %v640, %v661
        %v678 = vadd.f32 %v643, %v662
        %v679 = vadd.f32 %v646, %v663
        %v680 = vld [vmem:[#allocation10 + $0x100] sm:$0xff]
        %v681 = vld [vmem:[#allocation10 + $0x108] sm:$0xff]
        %v682 = vld [vmem:[#allocation10 + $0x110] sm:$0xff]
        %v683 = vld [vmem:[#allocation10 + $0x118] sm:$0xff]
        %v684 = vld [vmem:[#allocation10 + $0x120] sm:$0xff]
        %v685 = vld [vmem:[#allocation10 + $0x128] sm:$0xff]
        %v686 = vld [vmem:[#allocation10 + $0x130] sm:$0xff]
        %v687 = vld [vmem:[#allocation10 + $0x138] sm:$0xff]
        %v688 = vld [vmem:[#allocation10 + $0x140] sm:$0xff]
        %v689 = vld [vmem:[#allocation10 + $0x148] sm:$0xff]
        %v690 = vld [vmem:[#allocation10 + $0x150] sm:$0xff]
        %v691 = vld [vmem:[#allocation10 + $0x158] sm:$0xff]
        %v692 = vld [vmem:[#allocation10 + $0x160] sm:$0xff]
        %v693 = vld [vmem:[#allocation10 + $0x168] sm:$0xff]
        %v694 = vld [vmem:[#allocation10 + $0x170] sm:$0xff]
        %v695 = vld [vmem:[#allocation10 + $0x178] sm:$0xff]
        %696 = vmatpush.msra.mxu0 %v695
        %697 = vmatpush.msra.mxu0 %v694
        %698 = vmatpush.msra.mxu0 %v693
        %699 = vmatpush.msra.mxu0 %v692
        %700 = vmatpush.msra.mxu0 %v691
        %701 = vmatpush.msra.mxu0 %v690
        %702 = vmatpush.msra.mxu0 %v689
        %703 = vmatpush.msra.mxu0 %v688
        %704 = vmatpush.msra.mxu0 %v687
        %705 = vmatpush.msra.mxu0 %v686
        %706 = vmatpush.msra.mxu0 %v685
        %707 = vmatpush.msra.mxu0 %v684
        %708 = vmatpush.msra.mxu0 %v683
        %709 = vmatpush.msra.mxu0 %v682
        %710 = vmatpush.msra.mxu0 %v681
        %711 = vmatpush.msra.mxu0 %v680
        %712 = vmatmul.f32.gmra.mxu0 %v664
        %v713 = vpop.f32.mrf.mxu0
        %v714 = vadd.f32 0.0, %v713
        %715 = vmatmul.f32.gmra.mxu0 %v665
        %v716 = vpop.f32.mrf.mxu0
        %v717 = vadd.f32 0.0, %v716
        %718 = vmatmul.f32.gmra.mxu0 %v666
        %v719 = vpop.f32.mrf.mxu0
        %v720 = vadd.f32 0.0, %v719
        %721 = vmatmul.f32.gmra.mxu0 %v667
        %v722 = vpop.f32.mrf.mxu0
        %v723 = vadd.f32 0.0, %v722
        %724 = vmatmul.f32.gmra.mxu0 %v668
        %v725 = vpop.f32.mrf.mxu0
        %v726 = vadd.f32 0.0, %v725
        %727 = vmatmul.f32.gmra.mxu0 %v669
        %v728 = vpop.f32.mrf.mxu0
        %v729 = vadd.f32 0.0, %v728
        %730 = vmatmul.f32.gmra.mxu0 %v670
        %v731 = vpop.f32.mrf.mxu0
        %v732 = vadd.f32 0.0, %v731
        %733 = vmatmul.f32.gmra.mxu0 %v671
        %v734 = vpop.f32.mrf.mxu0
        %v735 = vadd.f32 0.0, %v734
        %736 = vmatmul.f32.gmra.mxu0 %v672
        %v737 = vpop.f32.mrf.mxu0
        %v738 = vadd.f32 0.0, %v737
        %739 = vmatmul.f32.gmra.mxu0 %v673
        %v740 = vpop.f32.mrf.mxu0
        %v741 = vadd.f32 0.0, %v740
        %742 = vmatmul.f32.gmra.mxu0 %v674
        %v743 = vpop.f32.mrf.mxu0
        %v744 = vadd.f32 0.0, %v743
        %745 = vmatmul.f32.gmra.mxu0 %v675
        %v746 = vpop.f32.mrf.mxu0
        %v747 = vadd.f32 0.0, %v746
        %748 = vmatmul.f32.gmra.mxu0 %v676
        %v749 = vpop.f32.mrf.mxu0
        %v750 = vadd.f32 0.0, %v749
        %751 = vmatmul.f32.gmra.mxu0 %v677
        %v752 = vpop.f32.mrf.mxu0
        %v753 = vadd.f32 0.0, %v752
        %754 = vmatmul.f32.gmra.mxu0 %v678
        %v755 = vpop.f32.mrf.mxu0
        %v756 = vadd.f32 0.0, %v755
        %757 = vmatmul.f32.gmra.mxu0 %v679
        %v758 = vpop.f32.mrf.mxu0
        %v759 = vadd.f32 0.0, %v758
        %760 = vdwg.mxu0
        %v761 = vpack.c.bf16 %v717, %v714
        %v762 = vpack.c.bf16 %v723, %v720
        %v763 = vpack.c.bf16 %v729, %v726
        %v764 = vpack.c.bf16 %v735, %v732
        %v765 = vpack.c.bf16 %v741, %v738
        %v766 = vpack.c.bf16 %v747, %v744
        %v767 = vpack.c.bf16 %v753, %v750
        %v768 = vpack.c.bf16 %v759, %v756
        %v785 = vunpack.c.l.b16 %v434
        %v786 = vunpack.c.l.b16 %v435
        %v787 = vunpack.c.l.b16 %v436
        %v788 = vunpack.c.l.b16 %v437
        %v789 = vunpack.c.l.b16 %v438
        %v790 = vunpack.c.l.b16 %v439
        %v791 = vunpack.c.l.b16 %v440
        %v792 = vunpack.c.l.b16 %v441
        %v793 = vunpack.c.l.b16 %v442
        %v794 = vunpack.c.l.b16 %v443
        %v795 = vunpack.c.l.b16 %v444
        %v796 = vunpack.c.l.b16 %v445
        %v797 = vunpack.c.l.b16 %v446
        %v798 = vunpack.c.l.b16 %v447
        %v799 = vunpack.c.l.b16 %v448
        %v800 = vunpack.c.l.b16 %v449
        %v801 = vpack.c.b16 %v786, %v785
        %v802 = vpack.c.b16 %v788, %v787
        %v803 = vpack.c.b16 %v790, %v789
        %v804 = vpack.c.b16 %v792, %v791
        %v805 = vpack.c.b16 %v794, %v793
        %v806 = vpack.c.b16 %v796, %v795
        %v807 = vpack.c.b16 %v798, %v797
        %v808 = vpack.c.b16 %v800, %v799
        %817 = vmatpush.bf16.msra.mxu0 %v768
        %818 = vmatpush.bf16.msra.mxu0 %v767
        %819 = vmatpush.bf16.msra.mxu0 %v766
        %820 = vmatpush.bf16.msra.mxu0 %v765
        %821 = vmatpush.bf16.msra.mxu0 %v764
        %822 = vmatpush.bf16.msra.mxu0 %v763
        %823 = vmatpush.bf16.msra.mxu0 %v762
        %824 = vmatpush.bf16.msra.mxu0 %v761
        %825 = vmatmul.bf16.gmra.mxu0 %v801
        %v826 = vpop.f32.mrf.mxu0
        %v827 = vadd.f32 0.0, %v826
        %v828 = vpop.f32.mrf.mxu0
        %v829 = vadd.f32 0.0, %v828
        %830 = vmatmul.bf16.gmra.mxu0 %v802
        %v831 = vpop.f32.mrf.mxu0
        %v832 = vadd.f32 0.0, %v831
        %v833 = vpop.f32.mrf.mxu0
        %v834 = vadd.f32 0.0, %v833
        %835 = vmatmul.bf16.gmra.mxu0 %v803
        %v836 = vpop.f32.mrf.mxu0
        %v837 = vadd.f32 0.0, %v836
        %v838 = vpop.f32.mrf.mxu0
        %v839 = vadd.f32 0.0, %v838
        %840 = vmatmul.bf16.gmra.mxu0 %v804
        %v841 = vpop.f32.mrf.mxu0
        %v842 = vadd.f32 0.0, %v841
        %v843 = vpop.f32.mrf.mxu0
        %v844 = vadd.f32 0.0, %v843
        %845 = vmatmul.bf16.gmra.mxu0 %v805
        %v846 = vpop.f32.mrf.mxu0
        %v847 = vadd.f32 0.0, %v846
        %v848 = vpop.f32.mrf.mxu0
        %v849 = vadd.f32 0.0, %v848
        %850 = vmatmul.bf16.gmra.mxu0 %v806
        %v851 = vpop.f32.mrf.mxu0
        %v852 = vadd.f32 0.0, %v851
        %v853 = vpop.f32.mrf.mxu0
        %v854 = vadd.f32 0.0, %v853
        %855 = vmatmul.bf16.gmra.mxu0 %v807
        %v856 = vpop.f32.mrf.mxu0
        %v857 = vadd.f32 0.0, %v856
        %v858 = vpop.f32.mrf.mxu0
        %v859 = vadd.f32 0.0, %v858
        %860 = vmatmul.bf16.gmra.mxu0 %v808
        %v861 = vpop.f32.mrf.mxu0
        %v862 = vadd.f32 0.0, %v861
        %v863 = vpop.f32.mrf.mxu0
        %v864 = vadd.f32 0.0, %v863
        %865 = vdwg.mxu0
        %v866 = vadd.f32 %v714, %v827
        %v867 = vadd.f32 %v717, %v829
        %v868 = vadd.f32 %v720, %v832
        %v869 = vadd.f32 %v723, %v834
        %v870 = vadd.f32 %v726, %v837
        %v871 = vadd.f32 %v729, %v839
        %v872 = vadd.f32 %v732, %v842
        %v873 = vadd.f32 %v735, %v844
        %v874 = vadd.f32 %v738, %v847
        %v875 = vadd.f32 %v741, %v849
        %v876 = vadd.f32 %v744, %v852
        %v877 = vadd.f32 %v747, %v854
        %v878 = vadd.f32 %v750, %v857
        %v879 = vadd.f32 %v753, %v859
        %v880 = vadd.f32 %v756, %v862
        %v881 = vadd.f32 %v759, %v864
        %v882 = vld [vmem:[#allocation11 + $0x2] sm:$0x1]
        %v883 = vperm.slane %v882, 0
        %v884 = vadd.f32 %v866, %v883
        %v885 = vadd.f32 %v867, %v883
        %v886 = vadd.f32 %v868, %v883
        %v887 = vadd.f32 %v869, %v883
        %v888 = vadd.f32 %v870, %v883
        %v889 = vadd.f32 %v871, %v883
        %v890 = vadd.f32 %v872, %v883
        %v891 = vadd.f32 %v873, %v883
        %v892 = vadd.f32 %v874, %v883
        %v893 = vadd.f32 %v875, %v883
        %v894 = vadd.f32 %v876, %v883
        %v895 = vadd.f32 %v877, %v883
        %v896 = vadd.f32 %v878, %v883
        %v897 = vadd.f32 %v879, %v883
        %v898 = vadd.f32 %v880, %v883
        %v899 = vadd.f32 %v881, %v883
        %v900 = vmax.f32 %v884, 0.0
        %v901 = vmax.f32 %v885, 0.0
        %v902 = vmax.f32 %v886, 0.0
        %v903 = vmax.f32 %v887, 0.0
        %v904 = vmax.f32 %v888, 0.0
        %v905 = vmax.f32 %v889, 0.0
        %v906 = vmax.f32 %v890, 0.0
        %v907 = vmax.f32 %v891, 0.0
        %v908 = vmax.f32 %v892, 0.0
        %v909 = vmax.f32 %v893, 0.0
        %v910 = vmax.f32 %v894, 0.0
        %v911 = vmax.f32 %v895, 0.0
        %v912 = vmax.f32 %v896, 0.0
        %v913 = vmax.f32 %v897, 0.0
        %v914 = vmax.f32 %v898, 0.0
        %v915 = vmax.f32 %v899, 0.0
        %v916 = vld [vmem:[#allocation10 + $0x180] sm:$0xff]
        %v917 = vld [vmem:[#allocation10 + $0x188] sm:$0xff]
        %v918 = vld [vmem:[#allocation10 + $0x190] sm:$0xff]
        %v919 = vld [vmem:[#allocation10 + $0x198] sm:$0xff]
        %v920 = vld [vmem:[#allocation10 + $0x1a0] sm:$0xff]
        %v921 = vld [vmem:[#allocation10 + $0x1a8] sm:$0xff]
        %v922 = vld [vmem:[#allocation10 + $0x1b0] sm:$0xff]
        %v923 = vld [vmem:[#allocation10 + $0x1b8] sm:$0xff]
        %v924 = vld [vmem:[#allocation10 + $0x1c0] sm:$0xff]
        %v925 = vld [vmem:[#allocation10 + $0x1c8] sm:$0xff]
        %v926 = vld [vmem:[#allocation10 + $0x1d0] sm:$0xff]
        %v927 = vld [vmem:[#allocation10 + $0x1d8] sm:$0xff]
        %v928 = vld [vmem:[#allocation10 + $0x1e0] sm:$0xff]
        %v929 = vld [vmem:[#allocation10 + $0x1e8] sm:$0xff]
        %v930 = vld [vmem:[#allocation10 + $0x1f0] sm:$0xff]
        %v931 = vld [vmem:[#allocation10 + $0x1f8] sm:$0xff]
        %v932 = vld [vmem:[#allocation11 + $0x3] sm:$0x1]
        %v933 = vperm.slane %v932, 0
        %934 = vmatpush.msra.mxu0 %v931
        %935 = vmatpush.msra.mxu0 %v930
        %936 = vmatpush.msra.mxu0 %v929
        %937 = vmatpush.msra.mxu0 %v928
        %938 = vmatpush.msra.mxu0 %v927
        %939 = vmatpush.msra.mxu0 %v926
        %940 = vmatpush.msra.mxu0 %v925
        %941 = vmatpush.msra.mxu0 %v924
        %942 = vmatpush.msra.mxu0 %v923
        %943 = vmatpush.msra.mxu0 %v922
        %944 = vmatpush.msra.mxu0 %v921
        %945 = vmatpush.msra.mxu0 %v920
        %946 = vmatpush.msra.mxu0 %v919
        %947 = vmatpush.msra.mxu0 %v918
        %948 = vmatpush.msra.mxu0 %v917
        %949 = vmatpush.msra.mxu0 %v916
        %950 = vmatmul.f32.gmra.mxu0 %v900
        %v951 = vpop.f32.mrf.mxu0
        %v952 = vadd.f32 %v933, %v951
        %953 = vmatmul.f32.gmra.mxu0 %v901
        %v954 = vpop.f32.mrf.mxu0
        %v955 = vadd.f32 %v933, %v954
        %956 = vmatmul.f32.gmra.mxu0 %v902
        %v957 = vpop.f32.mrf.mxu0
        %v958 = vadd.f32 %v933, %v957
        %959 = vmatmul.f32.gmra.mxu0 %v903
        %v960 = vpop.f32.mrf.mxu0
        %v961 = vadd.f32 %v933, %v960
        %962 = vmatmul.f32.gmra.mxu0 %v904
        %v963 = vpop.f32.mrf.mxu0
        %v964 = vadd.f32 %v933, %v963
        %965 = vmatmul.f32.gmra.mxu0 %v905
        %v966 = vpop.f32.mrf.mxu0
        %v967 = vadd.f32 %v933, %v966
        %968 = vmatmul.f32.gmra.mxu0 %v906
        %v969 = vpop.f32.mrf.mxu0
        %v970 = vadd.f32 %v933, %v969
        %971 = vmatmul.f32.gmra.mxu0 %v907
        %v972 = vpop.f32.mrf.mxu0
        %v973 = vadd.f32 %v933, %v972
        %974 = vmatmul.f32.gmra.mxu0 %v908
        %v975 = vpop.f32.mrf.mxu0
        %v976 = vadd.f32 %v933, %v975
        %977 = vmatmul.f32.gmra.mxu0 %v909
        %v978 = vpop.f32.mrf.mxu0
        %v979 = vadd.f32 %v933, %v978
        %980 = vmatmul.f32.gmra.mxu0 %v910
        %v981 = vpop.f32.mrf.mxu0
        %v982 = vadd.f32 %v933, %v981
        %983 = vmatmul.f32.gmra.mxu0 %v911
        %v984 = vpop.f32.mrf.mxu0
        %v985 = vadd.f32 %v933, %v984
        %986 = vmatmul.f32.gmra.mxu0 %v912
        %v987 = vpop.f32.mrf.mxu0
        %v988 = vadd.f32 %v933, %v987
        %989 = vmatmul.f32.gmra.mxu0 %v913
        %v990 = vpop.f32.mrf.mxu0
        %v991 = vadd.f32 %v933, %v990
        %992 = vmatmul.f32.gmra.mxu0 %v914
        %v993 = vpop.f32.mrf.mxu0
        %v994 = vadd.f32 %v933, %v993
        %995 = vmatmul.f32.gmra.mxu0 %v915
        %v996 = vpop.f32.mrf.mxu0
        %v997 = vadd.f32 %v933, %v996
        %998 = vdwg.mxu0
        %v999 = vmax.f32 %v952, 0.0
        %v1000 = vmax.f32 %v955, 0.0
        %v1001 = vmax.f32 %v958, 0.0
        %v1002 = vmax.f32 %v961, 0.0
        %v1003 = vmax.f32 %v964, 0.0
        %v1004 = vmax.f32 %v967, 0.0
        %v1005 = vmax.f32 %v970, 0.0
        %v1006 = vmax.f32 %v973, 0.0
        %v1007 = vmax.f32 %v976, 0.0
        %v1008 = vmax.f32 %v979, 0.0
        %v1009 = vmax.f32 %v982, 0.0
        %v1010 = vmax.f32 %v985, 0.0
        %v1011 = vmax.f32 %v988, 0.0
        %v1012 = vmax.f32 %v991, 0.0
        %v1013 = vmax.f32 %v994, 0.0
        %v1014 = vmax.f32 %v997, 0.0
        %v1015 = vld [vmem:[#allocation10 + $0x200] sm:$0xff]
        %v1016 = vld [vmem:[#allocation10 + $0x208] sm:$0xff]
        %v1017 = vld [vmem:[#allocation10 + $0x210] sm:$0xff]
        %v1018 = vld [vmem:[#allocation10 + $0x218] sm:$0xff]
        %v1019 = vld [vmem:[#allocation10 + $0x220] sm:$0xff]
        %v1020 = vld [vmem:[#allocation10 + $0x228] sm:$0xff]
        %v1021 = vld [vmem:[#allocation10 + $0x230] sm:$0xff]
        %v1022 = vld [vmem:[#allocation10 + $0x238] sm:$0xff]
        %v1023 = vld [vmem:[#allocation10 + $0x240] sm:$0xff]
        %v1024 = vld [vmem:[#allocation10 + $0x248] sm:$0xff]
        %v1025 = vld [vmem:[#allocation10 + $0x250] sm:$0xff]
        %v1026 = vld [vmem:[#allocation10 + $0x258] sm:$0xff]
        %v1027 = vld [vmem:[#allocation10 + $0x260] sm:$0xff]
        %v1028 = vld [vmem:[#allocation10 + $0x268] sm:$0xff]
        %v1029 = vld [vmem:[#allocation10 + $0x270] sm:$0xff]
        %v1030 = vld [vmem:[#allocation10 + $0x278] sm:$0xff]
        %1031 = vmatpush.msra.mxu0 %v1030
        %1032 = vmatpush.msra.mxu0 %v1029
        %1033 = vmatpush.msra.mxu0 %v1028
        %1034 = vmatpush.msra.mxu0 %v1027
        %1035 = vmatpush.msra.mxu0 %v1026
        %1036 = vmatpush.msra.mxu0 %v1025
        %1037 = vmatpush.msra.mxu0 %v1024
        %1038 = vmatpush.msra.mxu0 %v1023
        %1039 = vmatpush.msra.mxu0 %v1022
        %1040 = vmatpush.msra.mxu0 %v1021
        %1041 = vmatpush.msra.mxu0 %v1020
        %1042 = vmatpush.msra.mxu0 %v1019
        %1043 = vmatpush.msra.mxu0 %v1018
        %1044 = vmatpush.msra.mxu0 %v1017
        %1045 = vmatpush.msra.mxu0 %v1016
        %1046 = vmatpush.msra.mxu0 %v1015
        %1047 = vmatmul.f32.gmra.mxu0 %v999
        %v1048 = vpop.f32.mrf.mxu0
        %v1049 = vadd.f32 0.0, %v1048
        %1050 = vmatmul.f32.gmra.mxu0 %v1000
        %v1051 = vpop.f32.mrf.mxu0
        %v1052 = vadd.f32 0.0, %v1051
        %1053 = vmatmul.f32.gmra.mxu0 %v1001
        %v1054 = vpop.f32.mrf.mxu0
        %v1055 = vadd.f32 0.0, %v1054
        %1056 = vmatmul.f32.gmra.mxu0 %v1002
        %v1057 = vpop.f32.mrf.mxu0
        %v1058 = vadd.f32 0.0, %v1057
        %1059 = vmatmul.f32.gmra.mxu0 %v1003
        %v1060 = vpop.f32.mrf.mxu0
        %v1061 = vadd.f32 0.0, %v1060
        %1062 = vmatmul.f32.gmra.mxu0 %v1004
        %v1063 = vpop.f32.mrf.mxu0
        %v1064 = vadd.f32 0.0, %v1063
        %1065 = vmatmul.f32.gmra.mxu0 %v1005
        %v1066 = vpop.f32.mrf.mxu0
        %v1067 = vadd.f32 0.0, %v1066
        %1068 = vmatmul.f32.gmra.mxu0 %v1006
        %v1069 = vpop.f32.mrf.mxu0
        %v1070 = vadd.f32 0.0, %v1069
        %1071 = vmatmul.f32.gmra.mxu0 %v1007
        %v1072 = vpop.f32.mrf.mxu0
        %v1073 = vadd.f32 0.0, %v1072
        %1074 = vmatmul.f32.gmra.mxu0 %v1008
        %v1075 = vpop.f32.mrf.mxu0
        %v1076 = vadd.f32 0.0, %v1075
        %1077 = vmatmul.f32.gmra.mxu0 %v1009
        %v1078 = vpop.f32.mrf.mxu0
        %v1079 = vadd.f32 0.0, %v1078
        %1080 = vmatmul.f32.gmra.mxu0 %v1010
        %v1081 = vpop.f32.mrf.mxu0
        %v1082 = vadd.f32 0.0, %v1081
        %1083 = vmatmul.f32.gmra.mxu0 %v1011
        %v1084 = vpop.f32.mrf.mxu0
        %v1085 = vadd.f32 0.0, %v1084
        %1086 = vmatmul.f32.gmra.mxu0 %v1012
        %v1087 = vpop.f32.mrf.mxu0
        %v1088 = vadd.f32 0.0, %v1087
        %1089 = vmatmul.f32.gmra.mxu0 %v1013
        %v1090 = vpop.f32.mrf.mxu0
        %v1091 = vadd.f32 0.0, %v1090
        %1092 = vmatmul.f32.gmra.mxu0 %v1014
        %v1093 = vpop.f32.mrf.mxu0
        %v1094 = vadd.f32 0.0, %v1093
        %1095 = vdwg.mxu0
        %v1096 = vpack.c.bf16 %v1052, %v1049
        %v1097 = vpack.c.bf16 %v1058, %v1055
        %v1098 = vpack.c.bf16 %v1064, %v1061
        %v1099 = vpack.c.bf16 %v1070, %v1067
        %v1100 = vpack.c.bf16 %v1076, %v1073
        %v1101 = vpack.c.bf16 %v1082, %v1079
        %v1102 = vpack.c.bf16 %v1088, %v1085
        %v1103 = vpack.c.bf16 %v1094, %v1091
        %1104 = vmatpush.bf16.msra.mxu0 %v1103
        %1105 = vmatpush.bf16.msra.mxu0 %v1102
        %1106 = vmatpush.bf16.msra.mxu0 %v1101
        %1107 = vmatpush.bf16.msra.mxu0 %v1100
        %1108 = vmatpush.bf16.msra.mxu0 %v1099
        %1109 = vmatpush.bf16.msra.mxu0 %v1098
        %1110 = vmatpush.bf16.msra.mxu0 %v1097
        %1111 = vmatpush.bf16.msra.mxu0 %v1096
        %1112 = vmatmul.bf16.gmra.mxu0 %v801
        %v1113 = vpop.f32.mrf.mxu0
        %v1114 = vadd.f32 0.0, %v1113
        %v1115 = vpop.f32.mrf.mxu0
        %v1116 = vadd.f32 0.0, %v1115
        %1117 = vmatmul.bf16.gmra.mxu0 %v802
        %v1118 = vpop.f32.mrf.mxu0
        %v1119 = vadd.f32 0.0, %v1118
        %v1120 = vpop.f32.mrf.mxu0
        %v1121 = vadd.f32 0.0, %v1120
        %1122 = vmatmul.bf16.gmra.mxu0 %v803
        %v1123 = vpop.f32.mrf.mxu0
        %v1124 = vadd.f32 0.0, %v1123
        %v1125 = vpop.f32.mrf.mxu0
        %v1126 = vadd.f32 0.0, %v1125
        %1127 = vmatmul.bf16.gmra.mxu0 %v804
        %v1128 = vpop.f32.mrf.mxu0
        %v1129 = vadd.f32 0.0, %v1128
        %v1130 = vpop.f32.mrf.mxu0
        %v1131 = vadd.f32 0.0, %v1130
        %1132 = vmatmul.bf16.gmra.mxu0 %v805
        %v1133 = vpop.f32.mrf.mxu0
        %v1134 = vadd.f32 0.0, %v1133
        %v1135 = vpop.f32.mrf.mxu0
        %v1136 = vadd.f32 0.0, %v1135
        %1137 = vmatmul.bf16.gmra.mxu0 %v806
        %v1138 = vpop.f32.mrf.mxu0
        %v1139 = vadd.f32 0.0, %v1138
        %v1140 = vpop.f32.mrf.mxu0
        %v1141 = vadd.f32 0.0, %v1140
        %1142 = vmatmul.bf16.gmra.mxu0 %v807
        %v1143 = vpop.f32.mrf.mxu0
        %v1144 = vadd.f32 0.0, %v1143
        %v1145 = vpop.f32.mrf.mxu0
        %v1146 = vadd.f32 0.0, %v1145
        %1147 = vmatmul.bf16.gmra.mxu0 %v808
        %v1148 = vpop.f32.mrf.mxu0
        %v1149 = vadd.f32 0.0, %v1148
        %v1150 = vpop.f32.mrf.mxu0
        %v1151 = vadd.f32 0.0, %v1150
        %1152 = vdwg.mxu0
        %v1153 = vadd.f32 %v1049, %v1114
        %v1154 = vadd.f32 %v1052, %v1116
        %v1155 = vadd.f32 %v1055, %v1119
        %v1156 = vadd.f32 %v1058, %v1121
        %v1157 = vadd.f32 %v1061, %v1124
        %v1158 = vadd.f32 %v1064, %v1126
        %v1159 = vadd.f32 %v1067, %v1129
        %v1160 = vadd.f32 %v1070, %v1131
        %v1161 = vadd.f32 %v1073, %v1134
        %v1162 = vadd.f32 %v1076, %v1136
        %v1163 = vadd.f32 %v1079, %v1139
        %v1164 = vadd.f32 %v1082, %v1141
        %v1165 = vadd.f32 %v1085, %v1144
        %v1166 = vadd.f32 %v1088, %v1146
        %v1167 = vadd.f32 %v1091, %v1149
        %v1168 = vadd.f32 %v1094, %v1151
        %v1169 = vld [vmem:[#allocation11 + $0x4] sm:$0x1]
        %v1170 = vperm.slane %v1169, 0
        %v1171 = vadd.f32 %v1153, %v1170
        %v1172 = vadd.f32 %v1154, %v1170
        %v1173 = vadd.f32 %v1155, %v1170
        %v1174 = vadd.f32 %v1156, %v1170
        %v1175 = vadd.f32 %v1157, %v1170
        %v1176 = vadd.f32 %v1158, %v1170
        %v1177 = vadd.f32 %v1159, %v1170
        %v1178 = vadd.f32 %v1160, %v1170
        %v1179 = vadd.f32 %v1161, %v1170
        %v1180 = vadd.f32 %v1162, %v1170
        %v1181 = vadd.f32 %v1163, %v1170
        %v1182 = vadd.f32 %v1164, %v1170
        %v1183 = vadd.f32 %v1165, %v1170
        %v1184 = vadd.f32 %v1166, %v1170
        %v1185 = vadd.f32 %v1167, %v1170
        %v1186 = vadd.f32 %v1168, %v1170
        %v1187 = vmax.f32 %v1171, 0.0
        %v1188 = vmax.f32 %v1172, 0.0
        %v1189 = vmax.f32 %v1173, 0.0
        %v1190 = vmax.f32 %v1174, 0.0
        %v1191 = vmax.f32 %v1175, 0.0
        %v1192 = vmax.f32 %v1176, 0.0
        %v1193 = vmax.f32 %v1177, 0.0
        %v1194 = vmax.f32 %v1178, 0.0
        %v1195 = vmax.f32 %v1179, 0.0
        %v1196 = vmax.f32 %v1180, 0.0
        %v1197 = vmax.f32 %v1181, 0.0
        %v1198 = vmax.f32 %v1182, 0.0
        %v1199 = vmax.f32 %v1183, 0.0
        %v1200 = vmax.f32 %v1184, 0.0
        %v1201 = vmax.f32 %v1185, 0.0
        %v1202 = vmax.f32 %v1186, 0.0
        %v1203 = vld [vmem:[#allocation10 + $0x280] sm:$0xff]
        %v1204 = vld [vmem:[#allocation10 + $0x288] sm:$0xff]
        %v1205 = vld [vmem:[#allocation10 + $0x290] sm:$0xff]
        %v1206 = vld [vmem:[#allocation10 + $0x298] sm:$0xff]
        %v1207 = vld [vmem:[#allocation10 + $0x2a0] sm:$0xff]
        %v1208 = vld [vmem:[#allocation10 + $0x2a8] sm:$0xff]
        %v1209 = vld [vmem:[#allocation10 + $0x2b0] sm:$0xff]
        %v1210 = vld [vmem:[#allocation10 + $0x2b8] sm:$0xff]
        %v1211 = vld [vmem:[#allocation10 + $0x2c0] sm:$0xff]
        %v1212 = vld [vmem:[#allocation10 + $0x2c8] sm:$0xff]
        %v1213 = vld [vmem:[#allocation10 + $0x2d0] sm:$0xff]
        %v1214 = vld [vmem:[#allocation10 + $0x2d8] sm:$0xff]
        %v1215 = vld [vmem:[#allocation10 + $0x2e0] sm:$0xff]
        %v1216 = vld [vmem:[#allocation10 + $0x2e8] sm:$0xff]
        %v1217 = vld [vmem:[#allocation10 + $0x2f0] sm:$0xff]
        %v1218 = vld [vmem:[#allocation10 + $0x2f8] sm:$0xff]
        %v1219 = vld [vmem:[#allocation11 + $0x5] sm:$0x1]
        %v1220 = vperm.slane %v1219, 0
        %1221 = vmatpush.msra.mxu0 %v1218
        %1222 = vmatpush.msra.mxu0 %v1217
        %1223 = vmatpush.msra.mxu0 %v1216
        %1224 = vmatpush.msra.mxu0 %v1215
        %1225 = vmatpush.msra.mxu0 %v1214
        %1226 = vmatpush.msra.mxu0 %v1213
        %1227 = vmatpush.msra.mxu0 %v1212
        %1228 = vmatpush.msra.mxu0 %v1211
        %1229 = vmatpush.msra.mxu0 %v1210
        %1230 = vmatpush.msra.mxu0 %v1209
        %1231 = vmatpush.msra.mxu0 %v1208
        %1232 = vmatpush.msra.mxu0 %v1207
        %1233 = vmatpush.msra.mxu0 %v1206
        %1234 = vmatpush.msra.mxu0 %v1205
        %1235 = vmatpush.msra.mxu0 %v1204
        %1236 = vmatpush.msra.mxu0 %v1203
        %1237 = vmatmul.f32.gmra.mxu0 %v1187
        %v1238 = vpop.f32.mrf.mxu0
        %v1239 = vadd.f32 %v1220, %v1238
        %1240 = vmatmul.f32.gmra.mxu0 %v1188
        %v1241 = vpop.f32.mrf.mxu0
        %v1242 = vadd.f32 %v1220, %v1241
        %1243 = vmatmul.f32.gmra.mxu0 %v1189
        %v1244 = vpop.f32.mrf.mxu0
        %v1245 = vadd.f32 %v1220, %v1244
        %1246 = vmatmul.f32.gmra.mxu0 %v1190
        %v1247 = vpop.f32.mrf.mxu0
        %v1248 = vadd.f32 %v1220, %v1247
        %1249 = vmatmul.f32.gmra.mxu0 %v1191
        %v1250 = vpop.f32.mrf.mxu0
        %v1251 = vadd.f32 %v1220, %v1250
        %1252 = vmatmul.f32.gmra.mxu0 %v1192
        %v1253 = vpop.f32.mrf.mxu0
        %v1254 = vadd.f32 %v1220, %v1253
        %1255 = vmatmul.f32.gmra.mxu0 %v1193
        %v1256 = vpop.f32.mrf.mxu0
        %v1257 = vadd.f32 %v1220, %v1256
        %1258 = vmatmul.f32.gmra.mxu0 %v1194
        %v1259 = vpop.f32.mrf.mxu0
        %v1260 = vadd.f32 %v1220, %v1259
        %1261 = vmatmul.f32.gmra.mxu0 %v1195
        %v1262 = vpop.f32.mrf.mxu0
        %v1263 = vadd.f32 %v1220, %v1262
        %1264 = vmatmul.f32.gmra.mxu0 %v1196
        %v1265 = vpop.f32.mrf.mxu0
        %v1266 = vadd.f32 %v1220, %v1265
        %1267 = vmatmul.f32.gmra.mxu0 %v1197
        %v1268 = vpop.f32.mrf.mxu0
        %v1269 = vadd.f32 %v1220, %v1268
        %1270 = vmatmul.f32.gmra.mxu0 %v1198
        %v1271 = vpop.f32.mrf.mxu0
        %v1272 = vadd.f32 %v1220, %v1271
        %1273 = vmatmul.f32.gmra.mxu0 %v1199
        %v1274 = vpop.f32.mrf.mxu0
        %v1275 = vadd.f32 %v1220, %v1274
        %1276 = vmatmul.f32.gmra.mxu0 %v1200
        %v1277 = vpop.f32.mrf.mxu0
        %v1278 = vadd.f32 %v1220, %v1277
        %1279 = vmatmul.f32.gmra.mxu0 %v1201
        %v1280 = vpop.f32.mrf.mxu0
        %v1281 = vadd.f32 %v1220, %v1280
        %1282 = vmatmul.f32.gmra.mxu0 %v1202
        %v1283 = vpop.f32.mrf.mxu0
        %v1284 = vadd.f32 %v1220, %v1283
        %1285 = vdwg.mxu0
        %v1286 = vmax.f32 %v1239, 0.0
        %v1287 = vmax.f32 %v1242, 0.0
        %v1288 = vmax.f32 %v1245, 0.0
        %v1289 = vmax.f32 %v1248, 0.0
        %v1290 = vmax.f32 %v1251, 0.0
        %v1291 = vmax.f32 %v1254, 0.0
        %v1292 = vmax.f32 %v1257, 0.0
        %v1293 = vmax.f32 %v1260, 0.0
        %v1294 = vmax.f32 %v1263, 0.0
        %v1295 = vmax.f32 %v1266, 0.0
        %v1296 = vmax.f32 %v1269, 0.0
        %v1297 = vmax.f32 %v1272, 0.0
        %v1298 = vmax.f32 %v1275, 0.0
        %v1299 = vmax.f32 %v1278, 0.0
        %v1300 = vmax.f32 %v1281, 0.0
        %v1301 = vmax.f32 %v1284, 0.0
        %v1302 = vld [vmem:[%s376] sm:$0xf]
        %v1303 = vpack.c.bf16 %v1287, %v1286
        %v1304 = vpack.c.bf16 %v1289, %v1288
        %v1305 = vpack.c.bf16 %v1291, %v1290
        %v1306 = vpack.c.bf16 %v1293, %v1292
        %v1307 = vpack.c.bf16 %v1295, %v1294
        %v1308 = vpack.c.bf16 %v1297, %v1296
        %v1309 = vpack.c.bf16 %v1299, %v1298
        %v1310 = vpack.c.bf16 %v1301, %v1300
        %1311 = vmatpush.bf16.msra.mxu0 %v1310
        %1312 = vmatpush.bf16.msra.mxu0 %v1309
        %1313 = vmatpush.bf16.msra.mxu0 %v1308
        %1314 = vmatpush.bf16.msra.mxu0 %v1307
        %1315 = vmatpush.bf16.msra.mxu0 %v1306
        %1316 = vmatpush.bf16.msra.mxu0 %v1305
        %1317 = vmatpush.bf16.msra.mxu0 %v1304
        %1318 = vmatpush.bf16.msra.mxu0 %v1303
        %1319 = vmatmul.bf16.gmra.mxu0 %v1302
        %v1320 = vpop.f32.mrf.mxu0
        %v1321 = vadd.f32 0.0, %v1320
        %v1322 = vpop.f32.mrf.mxu0
        %1323 = vdwg.mxu0
        %v1324 = vld [vmem:[#allocation10 + $0x300] sm:$0xff]
        %v1325 = vld [vmem:[#allocation10 + $0x308] sm:$0xff]
        %v1326 = vld [vmem:[#allocation10 + $0x310] sm:$0xff]
        %v1327 = vld [vmem:[#allocation10 + $0x318] sm:$0xff]
        %v1328 = vld [vmem:[#allocation10 + $0x320] sm:$0xff]
        %v1329 = vld [vmem:[#allocation10 + $0x328] sm:$0xff]
        %v1330 = vld [vmem:[#allocation10 + $0x330] sm:$0xff]
        %v1331 = vld [vmem:[#allocation10 + $0x338] sm:$0xff]
        %v1332 = vld [vmem:[#allocation10 + $0x340] sm:$0xff]
        %v1333 = vld [vmem:[#allocation10 + $0x348] sm:$0xff]
        %v1334 = vld [vmem:[#allocation10 + $0x350] sm:$0xff]
        %v1335 = vld [vmem:[#allocation10 + $0x358] sm:$0xff]
        %v1336 = vld [vmem:[#allocation10 + $0x360] sm:$0xff]
        %v1337 = vld [vmem:[#allocation10 + $0x368] sm:$0xff]
        %v1338 = vld [vmem:[#allocation10 + $0x370] sm:$0xff]
        %v1339 = vld [vmem:[#allocation10 + $0x378] sm:$0xff]
        %v1340 = vld [vmem:[#allocation11 + $0x6] sm:$0x1]
        %v1341 = vperm.slane %v1340, 0
        %1342 = vmatpush.msra.mxu0 %v1339
        %1343 = vmatpush.msra.mxu0 %v1338
        %1344 = vmatpush.msra.mxu0 %v1337
        %1345 = vmatpush.msra.mxu0 %v1336
        %1346 = vmatpush.msra.mxu0 %v1335
        %1347 = vmatpush.msra.mxu0 %v1334
        %1348 = vmatpush.msra.mxu0 %v1333
        %1349 = vmatpush.msra.mxu0 %v1332
        %1350 = vmatpush.msra.mxu0 %v1331
        %1351 = vmatpush.msra.mxu0 %v1330
        %1352 = vmatpush.msra.mxu0 %v1329
        %1353 = vmatpush.msra.mxu0 %v1328
        %1354 = vmatpush.msra.mxu0 %v1327
        %1355 = vmatpush.msra.mxu0 %v1326
        %1356 = vmatpush.msra.mxu0 %v1325
        %1357 = vmatpush.msra.mxu0 %v1324
        %1358 = vmatmul.f32.gmra.mxu0 %v1321
        %v1359 = vpop.f32.mrf.mxu0
        %v1360 = vadd.f32 %v1341, %v1359
        %1361 = vdwg.mxu0
        %v1362 = vmax.f32 %v1360, 0.0
        %v1363 = vld [vmem:[#allocation10 + $0x380] sm:$0xff]
        %v1364 = vld [vmem:[#allocation10 + $0x388] sm:$0xff]
        %v1365 = vld [vmem:[#allocation10 + $0x390] sm:$0xff]
        %v1366 = vld [vmem:[#allocation10 + $0x398] sm:$0xff]
        %v1367 = vld [vmem:[#allocation10 + $0x3a0] sm:$0xff]
        %v1368 = vld [vmem:[#allocation10 + $0x3a8] sm:$0xff]
        %v1369 = vld [vmem:[#allocation10 + $0x3b0] sm:$0xff]
        %v1370 = vld [vmem:[#allocation10 + $0x3b8] sm:$0xff]
        %v1371 = vld [vmem:[#allocation10 + $0x3c0] sm:$0xff]
        %v1372 = vld [vmem:[#allocation10 + $0x3c8] sm:$0xff]
        %v1373 = vld [vmem:[#allocation10 + $0x3d0] sm:$0xff]
        %v1374 = vld [vmem:[#allocation10 + $0x3d8] sm:$0xff]
        %v1375 = vld [vmem:[#allocation10 + $0x3e0] sm:$0xff]
        %v1376 = vld [vmem:[#allocation10 + $0x3e8] sm:$0xff]
        %v1377 = vld [vmem:[#allocation10 + $0x3f0] sm:$0xff]
        %v1378 = vld [vmem:[#allocation10 + $0x3f8] sm:$0xff]
        %v1379 = vld [vmem:[#allocation11 + $0x7] sm:$0x1]
        %v1380 = vperm.slane %v1379, 0
        %1381 = vmatpush.msra.mxu0 %v1378
        %1382 = vmatpush.msra.mxu0 %v1377
        %1383 = vmatpush.msra.mxu0 %v1376
        %1384 = vmatpush.msra.mxu0 %v1375
        %1385 = vmatpush.msra.mxu0 %v1374
        %1386 = vmatpush.msra.mxu0 %v1373
        %1387 = vmatpush.msra.mxu0 %v1372
        %1388 = vmatpush.msra.mxu0 %v1371
        %1389 = vmatpush.msra.mxu0 %v1370
        %1390 = vmatpush.msra.mxu0 %v1369
        %1391 = vmatpush.msra.mxu0 %v1368
        %1392 = vmatpush.msra.mxu0 %v1367
        %1393 = vmatpush.msra.mxu0 %v1366
        %1394 = vmatpush.msra.mxu0 %v1365
        %1395 = vmatpush.msra.mxu0 %v1364
        %1396 = vmatpush.msra.mxu0 %v1363
        %1397 = vmatmul.f32.gmra.mxu0 %v1362
        %v1398 = vpop.f32.mrf.mxu0
        %v1399 = vadd.f32 %v1380, %v1398
        %1400 = vdwg.mxu0
        %1401 = vst [vmem:[%s430] sm:$0xff] %v1399
        %s1402 = sand.u32 %s188, 1
        %s1403 = scalar_lea.sflag [#allocation4], %s1402
        %s1404 = sand.u32 %s188, 1
        %s1405 = smul.addr %s1404, 8
        %s1406 = scalar_lea.vmem [#allocation13], %s1405
        // Predicated region
        $region69: #{tpu_custom_call.1} parent=43 // pred_check
          %p1407 = pneg %p198
        $region70: #{tpu_custom_call.1} parent=43 // pred_check_branch
          %1409 = sbr.rel (%p1407) target = $region72
        $region71: #{tpu_custom_call.1} parent=43 // pred_region
          %1411 = vsyncadd %s1403, 0
          %s1412 = smul.addr %s30, 8
          %s1413 = scalar_lea.hbm %s6, %s1412
          %s1415 = sshll.u32 %s1406, 4
          %s1416 = int_to_ptr.vmem [resolvable:$true] %s1415
          %s1417 = sshll.u32 %s1413, 4
          %s1418 = int_to_ptr.hbm [resolvable:$true] %s1417
          %1420 = dma.vmem_to_hbm [thread:$0]  %s1416, 128, %s1418, %s1403
        $region72: #{tpu_custom_call.1} parent=43 // pred_fallthru
          _
      $region44: #{tpu_custom_call.1} parent=5 // pred_fallthru
        _
      %p1421 = scmp.le.s32.totalorder 2, %s25
      // Predicated region
      $region73: #{tpu_custom_call.1} parent=5 // pred_check
        %p1422 = pneg %p1421
      $region74: #{tpu_custom_call.1} parent=5 // pred_check_branch
        %1424 = sbr.rel (%p1422) target = $region76
      $region75: #{tpu_custom_call.1} parent=5 // pred_region
        %s1425 = ssub.s32 %s25, 2
        // Predicated region
        $region77: #{tpu_custom_call.1} parent=75 // pred_check
          %p1426 = pneg %p204
        $region78: #{tpu_custom_call.1} parent=75 // pred_check_branch
          %1428 = sbr.rel (%p1426) target = $region80
        $region79: #{tpu_custom_call.1} parent=75 // pred_region
          %s1429 = sand.u32 %s189, 1
          %s1430 = scalar_lea.sflag [#allocation4], %s1429
          %s1431 = sand.u32 %s189, 1
          %s1432 = smul.addr %s1431, 8
          %s1433 = scalar_lea.vmem [#allocation13], %s1432
          %1435 = dma.done %s1430, 128
        $region80: #{tpu_custom_call.1} parent=75 // pred_fallthru
          _
      $region76: #{tpu_custom_call.1} parent=5 // pred_fallthru
        _
    $region6: #{tpu_custom_call.1} parent=1 // loop_footer
      %s29 = sadd.s32 1, %s25
    $region7: #{tpu_custom_call.1} parent=1 // loop_footer_branch
      %24 = sbr.rel target = $region3
    $region8: #{tpu_custom_call.1} parent=1 // loop_exit
      _
    %1436 = vsyncpa [#allocation3], 1
    %s1437 = scalar_lea.sflag [#allocation3], 1
    %1438 = vsyncpa %s1437, 1
    %1439 = vsyncpa [#allocation6], 1
    %s1440 = scalar_lea.sflag [#allocation6], 1
    %1441 = vsyncpa %s1440, 1
    %1442 = vsyncpa [#allocation9], 1
    %s1443 = scalar_lea.sflag [#allocation9], 1
    %1444 = vsyncpa %s1443, 1
    %1445 = vsyncpa [#allocation12], 1
    %1446 = vsyncpa [#allocation4], 1
    %s1447 = scalar_lea.sflag [#allocation4], 1
    %1448 = vsyncpa %s1447, 1

</llo_original>
